<compile_context>
chip_gen: v7x
topology: tpu7x:2x2x1
jax: 0.10.0
libtpu: 0.0.40
codegen_flags: <defaults>
</compile_context>

<pallas_src>
import functools

import jax
import jax.numpy as jnp
from jax.experimental import pallas as pl
from jax.experimental.pallas import tpu as pltpu


def _mha_kernel(x_ref, wqkv_ref, b_ref, wo_ref, o_ref, head_ref, *,
                batch: int, seq: int, d_model: int, num_heads: int, d_k: int):
    bn = batch * seq

    # --- Fused Q/K/V projections -------------------------------------------------
    # One 3-way batched bf16 matmul with f32 accumulation.  Weights arrive already
    # transposed to (in, out) and the 1/sqrt(d_k) scale is folded into slot 0 (W_q).
    x = x_ref[...].astype(jnp.bfloat16)                        # (3, B*N, D)
    proj = jnp.einsum('sbd,sde->sbe', x, wqkv_ref[...],
                      preferred_element_type=jnp.float32)      # (3, B*N, D) f32

    # Bias add (f32), then (B*N, D) -> (B, N, D) leading-dim split (re-indexing only).
    q3 = (proj[0] + b_ref[0:1, :]).reshape(batch, seq, d_model)
    k3 = (proj[1] + b_ref[1:2, :]).reshape(batch, seq, d_model)
    v3 = (proj[2] + b_ref[2:3, :]).reshape(batch, seq, d_model)

    # bf16 copies feed the MXU; softmax statistics stay in f32.
    qb = q3.astype(jnp.bfloat16)
    kb = k3.astype(jnp.bfloat16)
    vb = v3.astype(jnp.bfloat16)

    # --- Per-head attention -------------------------------------------------------
    # Heads are few and static: unrolled loop of batch-leading 3-D einsums per head.
    # Each head's context is written to its lane slice of the (B*N, D) scratch so the
    # 'b h n d -> b n (h d)' concat is just lane placement and the output projection
    # below is one full-D matmul.
    # TODO(synk): optional `mask` / `padding_mask` masked_fill(-1e9) not wired in
    # (both are None in this instantiation); add as extra bool inputs if needed.
    for h in range(num_heads):
        lo = h * d_k
        qh = qb[:, :, lo:lo + d_k]                              # (B, N, d_k)
        kh = kb[:, :, lo:lo + d_k]
        vh = vb[:, :, lo:lo + d_k]

        # Scores (scale already folded into W_q); batched over B, f32 accumulation.
        s = jnp.einsum('bnd,bmd->bnm', qh, kh,
                       preferred_element_type=jnp.float32)      # (B, N, N) f32
        s = s - jnp.max(s, axis=-1, keepdims=True)
        e = jnp.exp(s)
        p = e * pl.reciprocal(jnp.sum(e, axis=-1, keepdims=True), approx=True)

        oh = jnp.einsum('bnm,bmd->bnd', p.astype(jnp.bfloat16), vh,
                        preferred_element_type=jnp.float32)     # (B, N, d_k) f32

        head_ref[:, lo:lo + d_k] = oh.reshape(bn, d_k)

    # --- Output projection ---------------------------------------------------------
    # Single (B*N, D) x (D, D) bf16 matmul (K = d_model, one MXU sequence).
    out = jnp.dot(head_ref[...].astype(jnp.bfloat16), wo_ref[...],
                  preferred_element_type=jnp.float32) + b_ref[3:4, :]
    # Dropout(p=0.0) is the identity.
    o_ref[...] = out.astype(o_ref.dtype)


def multi_headed_attention(q, k, v, params, num_heads: int):
    """q, k, v: (B, N, D) float32. params: dict of PyTorch-layout weights/biases."""
    B, N, D = q.shape
    assert D % num_heads == 0
    d_k = D // num_heads
    scale = float(d_k) ** -0.5
    BN = B * N

    # One-time wrapper-side prep (outside the kernel, free per step):
    #  * transpose weights to (in, out) so the kernel never transposes,
    #  * fold the 1/sqrt(d_k) score scale into the q projection,
    #  * stack the three projection weights and the four biases,
    #  * pre-cast MXU weight operands to bf16 (halves weight DMA bytes).
    wqkv = jnp.stack([params["wq"].T * scale,
                      params["wk"].T,
                      params["wv"].T]).astype(jnp.bfloat16)          # (3, D, D) bf16
    wo_t = params["wo"].T.astype(jnp.bfloat16)                       # (D, D)   bf16
    biases = jnp.concatenate([params["bq"] * scale, params["bk"],
                              params["bv"], params["bo"]], axis=0)   # (4, D)   f32

    x = jnp.stack([q.reshape(BN, D), k.reshape(BN, D), v.reshape(BN, D)])  # (3, BN, D)

    kernel = functools.partial(_mha_kernel, batch=B, seq=N, d_model=D,
                               num_heads=num_heads, d_k=d_k)

    vmem_spec = pl.BlockSpec(memory_space=pltpu.MemorySpace.VMEM)

    flops = 8 * BN * D * D + 4 * BN * N * D                      # projections + attention
    transcendentals = B * num_heads * N * N + B * num_heads * N  # exp + reciprocal
    bytes_accessed = (4 * 3 * BN * D      # stacked activations (f32 in)
                      + 2 * 4 * D * D     # wqkv + wo (bf16)
                      + 4 * 4 * D         # biases (f32)
                      + 4 * BN * D)       # output (f32)

    out = pl.pallas_call(
        kernel,
        out_shape=jax.ShapeDtypeStruct((BN, D), q.dtype),
        in_specs=[vmem_spec] * 4,
        out_specs=vmem_spec,
        scratch_shapes=[pltpu.VMEM((BN, D), jnp.float32)],
        cost_estimate=pl.CostEstimate(flops=flops,
                                      transcendentals=transcendentals,
                                      bytes_accessed=bytes_accessed),
    )(x, wqkv, biases, wo_t)

    return out.reshape(B, N, D)


def _init_linear(key, d_in, d_out):
    # PyTorch nn.Linear default init: U(-1/sqrt(fan_in), 1/sqrt(fan_in)) for W and b.
    kw, kb = jax.random.split(key)
    bound = 1.0 / (d_in ** 0.5)
    w = jax.random.uniform(kw, (d_out, d_in), jnp.float32, -bound, bound)
    b = jax.random.uniform(kb, (1, d_out), jnp.float32, -bound, bound)
    return w, b


def _reference(q, k, v, params, num_heads):
    """Plain-JAX f32 reference mirroring the PyTorch forward."""
    B, N, D = q.shape
    d_k = D // num_heads
    scale = d_k ** -0.5

    def lin(x, w, b):
        return x @ w.T + b

    qp = lin(q, params["wq"], params["bq"]).reshape(B, N, num_heads, d_k).transpose(0, 2, 1, 3)
    kp = lin(k, params["wk"], params["bk"]).reshape(B, N, num_heads, d_k).transpose(0, 2, 1, 3)
    vp = lin(v, params["wv"], params["bv"]).reshape(B, N, num_heads, d_k).transpose(0, 2, 1, 3)

    dots = jnp.einsum("bhid,bhjd->bhij", qp, kp) * scale
    attn = jax.nn.softmax(dots, axis=-1)
    out = jnp.einsum("bhij,bhjd->bhid", attn, vp)
    out = out.transpose(0, 2, 1, 3).reshape(B, N, D)
    return lin(out, params["wo"], params["bo"])


if __name__ == "__main__":
    B, N, D, H = 2, 8, 32, 4

    root = jax.random.PRNGKey(0)
    k_q, k_k, k_v, k_pq, k_pk, k_pv, k_po = jax.random.split(root, 7)

    q = jax.random.normal(k_q, (B, N, D), jnp.float32)
    k = jax.random.normal(k_k, (B, N, D), jnp.float32)
    v = jax.random.normal(k_v, (B, N, D), jnp.float32)

    wq, bq = _init_linear(k_pq, D, D)
    wk, bk = _init_linear(k_pk, D, D)
    wv, bv = _init_linear(k_pv, D, D)
    wo, bo = _init_linear(k_po, D, D)
    params = dict(wq=wq, bq=bq, wk=wk, bk=bk, wv=wv, bv=bv, wo=wo, bo=bo)

    out = multi_headed_attention(q, k, v, params, H)
    out = jax.block_until_ready(out)

    ref = _reference(q, k, v, params, H)
    assert out.shape == (B, N, D)
    # Tolerance covers the bf16 MXU operands (f32 accumulation) and the EUP
    # approximate reciprocal in the softmax; structure is otherwise identical.
    assert jnp.allclose(out, ref, atol=3e-2, rtol=3e-2), "Pallas output mismatch vs reference"

    print("KERNEL_OK")
</pallas_src>

<mosaic_0001>
module attributes {stable_mosaic.version = 11 : i64} {
  func.func @_mha_kernel(%arg0: memref<3x16x32xf32, #tpu.memory_space<vmem>>, %arg1: memref<3x32x32xbf16, #tpu.memory_space<vmem>>, %arg2: memref<4x32xf32, #tpu.memory_space<vmem>>, %arg3: memref<32x32xbf16, #tpu.memory_space<vmem>>, %arg4: memref<16x32xf32, #tpu.memory_space<vmem>>, %arg5: memref<16x32xf32, #tpu.memory_space<vmem>>) attributes {dimension_semantics = [], scalar_prefetch = 0 : i64, scratch_operands = 1 : i64, tpu.core_type = #tpu.core_type<tc>} {
    %c0 = arith.constant 0 : index
    %c0_0 = arith.constant 0 : index
    %c0_1 = arith.constant 0 : index
    %0 = vector.load %arg0[%c0, %c0_0, %c0_1] : memref<3x16x32xf32, #tpu.memory_space<vmem>>, vector<3x16x32xf32>
    %1 = arith.truncf %0 : vector<3x16x32xf32> to vector<3x16x32xbf16>
    %c0_2 = arith.constant 0 : index
    %c0_3 = arith.constant 0 : index
    %c0_4 = arith.constant 0 : index
    %2 = vector.load %arg1[%c0_2, %c0_3, %c0_4] : memref<3x32x32xbf16, #tpu.memory_space<vmem>>, vector<3x32x32xbf16>
    "tpu.trace_start"() <{level = 10 : i32, message = "sbd,sde->sbe"}> : () -> ()
    %cst = arith.constant dense<0.000000e+00> : vector<3x16x32xf32>
    %3 = tpu.matmul %1, %2, %cst {dimension_numbers = #tpu.dot_dimension_numbers<[2], [1], [1], [2], [0, 0, 0, 1, 1, 2], [0], [0]>} : vector<3x16x32xbf16>, vector<3x32x32xbf16>, vector<3x16x32xf32> -> vector<3x16x32xf32>
    "tpu.trace_stop"() : () -> ()
    %4 = vector.extract_strided_slice %3 {offsets = [0, 0, 0], sizes = [1, 16, 32], strides = [1, 1, 1]} : vector<3x16x32xf32> to vector<1x16x32xf32>
    %5 = vector.shape_cast %4 : vector<1x16x32xf32> to vector<16x32xf32>
    %c0_5 = arith.constant 0 : index
    %c0_6 = arith.constant 0 : index
    %6 = vector.load %arg2[%c0_5, %c0_6] : memref<4x32xf32, #tpu.memory_space<vmem>>, vector<1x32xf32>
    %7 = vector.broadcast %6 : vector<1x32xf32> to vector<16x32xf32>
    %8 = arith.addf %5, %7 : vector<16x32xf32>
    %9 = vector.shape_cast %8 : vector<16x32xf32> to vector<2x8x32xf32>
    %10 = vector.extract_strided_slice %3 {offsets = [1, 0, 0], sizes = [1, 16, 32], strides = [1, 1, 1]} : vector<3x16x32xf32> to vector<1x16x32xf32>
    %11 = vector.shape_cast %10 : vector<1x16x32xf32> to vector<16x32xf32>
    %c1 = arith.constant 1 : index
    %c0_7 = arith.constant 0 : index
    %12 = vector.load %arg2[%c1, %c0_7] : memref<4x32xf32, #tpu.memory_space<vmem>>, vector<1x32xf32>
    %13 = vector.broadcast %12 : vector<1x32xf32> to vector<16x32xf32>
    %14 = arith.addf %11, %13 : vector<16x32xf32>
    %15 = vector.shape_cast %14 : vector<16x32xf32> to vector<2x8x32xf32>
    %16 = vector.extract_strided_slice %3 {offsets = [2, 0, 0], sizes = [1, 16, 32], strides = [1, 1, 1]} : vector<3x16x32xf32> to vector<1x16x32xf32>
    %17 = vector.shape_cast %16 : vector<1x16x32xf32> to vector<16x32xf32>
    %c2 = arith.constant 2 : index
    %c0_8 = arith.constant 0 : index
    %18 = vector.load %arg2[%c2, %c0_8] : memref<4x32xf32, #tpu.memory_space<vmem>>, vector<1x32xf32>
    %19 = vector.broadcast %18 : vector<1x32xf32> to vector<16x32xf32>
    %20 = arith.addf %17, %19 : vector<16x32xf32>
    %21 = vector.shape_cast %20 : vector<16x32xf32> to vector<2x8x32xf32>
    %22 = arith.truncf %9 : vector<2x8x32xf32> to vector<2x8x32xbf16>
    %23 = arith.truncf %15 : vector<2x8x32xf32> to vector<2x8x32xbf16>
    %24 = arith.truncf %21 : vector<2x8x32xf32> to vector<2x8x32xbf16>
    %25 = vector.extract_strided_slice %22 {offsets = [0, 0, 0], sizes = [2, 8, 8], strides = [1, 1, 1]} : vector<2x8x32xbf16> to vector<2x8x8xbf16>
    %26 = vector.extract_strided_slice %23 {offsets = [0, 0, 0], sizes = [2, 8, 8], strides = [1, 1, 1]} : vector<2x8x32xbf16> to vector<2x8x8xbf16>
    %27 = vector.extract_strided_slice %24 {offsets = [0, 0, 0], sizes = [2, 8, 8], strides = [1, 1, 1]} : vector<2x8x32xbf16> to vector<2x8x8xbf16>
    "tpu.trace_start"() <{level = 10 : i32, message = "bnd,bmd->bnm"}> : () -> ()
    %cst_9 = arith.constant dense<0.000000e+00> : vector<2x8x8xf32>
    %28 = tpu.matmul %25, %26, %cst_9 {dimension_numbers = #tpu.dot_dimension_numbers<[2], [2], [1], [1], [0, 0, 0, 1, 1, 1], [0], [0]>} : vector<2x8x8xbf16>, vector<2x8x8xbf16>, vector<2x8x8xf32> -> vector<2x8x8xf32>
    "tpu.trace_stop"() : () -> ()
    %cst_10 = arith.constant dense<0xFF800000> : vector<2x8xf32>
    %29 = vector.multi_reduction <maximumf>, %28, %cst_10 [2] : vector<2x8x8xf32> to vector<2x8xf32>
    %30 = vector.shape_cast %29 : vector<2x8xf32> to vector<2x8x1xf32>
    %31 = vector.broadcast %30 : vector<2x8x1xf32> to vector<2x8x8xf32>
    %32 = arith.subf %28, %31 : vector<2x8x8xf32>
    %33 = math.exp %32 : vector<2x8x8xf32>
    %cst_11 = arith.constant dense<0.000000e+00> : vector<2x8xf32>
    %34 = vector.multi_reduction <add>, %33, %cst_11 [2] : vector<2x8x8xf32> to vector<2x8xf32>
    %35 = vector.shape_cast %34 : vector<2x8xf32> to vector<2x8x1xf32>
    %36 = tpu.reciprocal %35 {approx = true} : vector<2x8x1xf32> -> vector<2x8x1xf32>
    %37 = vector.broadcast %36 : vector<2x8x1xf32> to vector<2x8x8xf32>
    %38 = arith.mulf %33, %37 : vector<2x8x8xf32>
    %39 = arith.truncf %38 : vector<2x8x8xf32> to vector<2x8x8xbf16>
    "tpu.trace_start"() <{level = 10 : i32, message = "bnm,bmd->bnd"}> : () -> ()
    %cst_12 = arith.constant dense<0.000000e+00> : vector<2x8x8xf32>
    %40 = tpu.matmul %39, %27, %cst_12 {dimension_numbers = #tpu.dot_dimension_numbers<[2], [1], [1], [2], [0, 0, 0, 1, 1, 2], [0], [0]>} : vector<2x8x8xbf16>, vector<2x8x8xbf16>, vector<2x8x8xf32> -> vector<2x8x8xf32>
    "tpu.trace_stop"() : () -> ()
    %41 = vector.shape_cast %40 : vector<2x8x8xf32> to vector<16x8xf32>
    %c0_13 = arith.constant 0 : index
    %c0_14 = arith.constant 0 : index
    %42 = vector.load %arg5[%c0_13, %c0_14] : memref<16x32xf32, #tpu.memory_space<vmem>>, vector<16x8xf32>
    tpu.vector_store %arg5[%c0_13, %c0_14], %41 {strides = array<i32>} : memref<16x32xf32, #tpu.memory_space<vmem>>, vector<16x8xf32>,
    %43 = vector.extract_strided_slice %22 {offsets = [0, 0, 8], sizes = [2, 8, 8], strides = [1, 1, 1]} : vector<2x8x32xbf16> to vector<2x8x8xbf16>
    %44 = vector.extract_strided_slice %23 {offsets = [0, 0, 8], sizes = [2, 8, 8], strides = [1, 1, 1]} : vector<2x8x32xbf16> to vector<2x8x8xbf16>
    %45 = vector.extract_strided_slice %24 {offsets = [0, 0, 8], sizes = [2, 8, 8], strides = [1, 1, 1]} : vector<2x8x32xbf16> to vector<2x8x8xbf16>
    "tpu.trace_start"() <{level = 10 : i32, message = "bnd,bmd->bnm"}> : () -> ()
    %cst_15 = arith.constant dense<0.000000e+00> : vector<2x8x8xf32>
    %46 = tpu.matmul %43, %44, %cst_15 {dimension_numbers = #tpu.dot_dimension_numbers<[2], [2], [1], [1], [0, 0, 0, 1, 1, 1], [0], [0]>} : vector<2x8x8xbf16>, vector<2x8x8xbf16>, vector<2x8x8xf32> -> vector<2x8x8xf32>
    "tpu.trace_stop"() : () -> ()
    %cst_16 = arith.constant dense<0xFF800000> : vector<2x8xf32>
    %47 = vector.multi_reduction <maximumf>, %46, %cst_16 [2] : vector<2x8x8xf32> to vector<2x8xf32>
    %48 = vector.shape_cast %47 : vector<2x8xf32> to vector<2x8x1xf32>
    %49 = vector.broadcast %48 : vector<2x8x1xf32> to vector<2x8x8xf32>
    %50 = arith.subf %46, %49 : vector<2x8x8xf32>
    %51 = math.exp %50 : vector<2x8x8xf32>
    %cst_17 = arith.constant dense<0.000000e+00> : vector<2x8xf32>
    %52 = vector.multi_reduction <add>, %51, %cst_17 [2] : vector<2x8x8xf32> to vector<2x8xf32>
    %53 = vector.shape_cast %52 : vector<2x8xf32> to vector<2x8x1xf32>
    %54 = tpu.reciprocal %53 {approx = true} : vector<2x8x1xf32> -> vector<2x8x1xf32>
    %55 = vector.broadcast %54 : vector<2x8x1xf32> to vector<2x8x8xf32>
    %56 = arith.mulf %51, %55 : vector<2x8x8xf32>
    %57 = arith.truncf %56 : vector<2x8x8xf32> to vector<2x8x8xbf16>
    "tpu.trace_start"() <{level = 10 : i32, message = "bnm,bmd->bnd"}> : () -> ()
    %cst_18 = arith.constant dense<0.000000e+00> : vector<2x8x8xf32>
    %58 = tpu.matmul %57, %45, %cst_18 {dimension_numbers = #tpu.dot_dimension_numbers<[2], [1], [1], [2], [0, 0, 0, 1, 1, 2], [0], [0]>} : vector<2x8x8xbf16>, vector<2x8x8xbf16>, vector<2x8x8xf32> -> vector<2x8x8xf32>
    "tpu.trace_stop"() : () -> ()
    %59 = vector.shape_cast %58 : vector<2x8x8xf32> to vector<16x8xf32>
    %c0_19 = arith.constant 0 : index
    %c8 = arith.constant 8 : index
    %60 = vector.load %arg5[%c0_19, %c8] : memref<16x32xf32, #tpu.memory_space<vmem>>, vector<16x8xf32>
    tpu.vector_store %arg5[%c0_19, %c8], %59 {strides = array<i32>} : memref<16x32xf32, #tpu.memory_space<vmem>>, vector<16x8xf32>,
    %61 = vector.extract_strided_slice %22 {offsets = [0, 0, 16], sizes = [2, 8, 8], strides = [1, 1, 1]} : vector<2x8x32xbf16> to vector<2x8x8xbf16>
    %62 = vector.extract_strided_slice %23 {offsets = [0, 0, 16], sizes = [2, 8, 8], strides = [1, 1, 1]} : vector<2x8x32xbf16> to vector<2x8x8xbf16>
    %63 = vector.extract_strided_slice %24 {offsets = [0, 0, 16], sizes = [2, 8, 8], strides = [1, 1, 1]} : vector<2x8x32xbf16> to vector<2x8x8xbf16>
    "tpu.trace_start"() <{level = 10 : i32, message = "bnd,bmd->bnm"}> : () -> ()
    %cst_20 = arith.constant dense<0.000000e+00> : vector<2x8x8xf32>
    %64 = tpu.matmul %61, %62, %cst_20 {dimension_numbers = #tpu.dot_dimension_numbers<[2], [2], [1], [1], [0, 0, 0, 1, 1, 1], [0], [0]>} : vector<2x8x8xbf16>, vector<2x8x8xbf16>, vector<2x8x8xf32> -> vector<2x8x8xf32>
    "tpu.trace_stop"() : () -> ()
    %cst_21 = arith.constant dense<0xFF800000> : vector<2x8xf32>
    %65 = vector.multi_reduction <maximumf>, %64, %cst_21 [2] : vector<2x8x8xf32> to vector<2x8xf32>
    %66 = vector.shape_cast %65 : vector<2x8xf32> to vector<2x8x1xf32>
    %67 = vector.broadcast %66 : vector<2x8x1xf32> to vector<2x8x8xf32>
    %68 = arith.subf %64, %67 : vector<2x8x8xf32>
    %69 = math.exp %68 : vector<2x8x8xf32>
    %cst_22 = arith.constant dense<0.000000e+00> : vector<2x8xf32>
    %70 = vector.multi_reduction <add>, %69, %cst_22 [2] : vector<2x8x8xf32> to vector<2x8xf32>
    %71 = vector.shape_cast %70 : vector<2x8xf32> to vector<2x8x1xf32>
    %72 = tpu.reciprocal %71 {approx = true} : vector<2x8x1xf32> -> vector<2x8x1xf32>
    %73 = vector.broadcast %72 : vector<2x8x1xf32> to vector<2x8x8xf32>
    %74 = arith.mulf %69, %73 : vector<2x8x8xf32>
    %75 = arith.truncf %74 : vector<2x8x8xf32> to vector<2x8x8xbf16>
    "tpu.trace_start"() <{level = 10 : i32, message = "bnm,bmd->bnd"}> : () -> ()
    %cst_23 = arith.constant dense<0.000000e+00> : vector<2x8x8xf32>
    %76 = tpu.matmul %75, %63, %cst_23 {dimension_numbers = #tpu.dot_dimension_numbers<[2], [1], [1], [2], [0, 0, 0, 1, 1, 2], [0], [0]>} : vector<2x8x8xbf16>, vector<2x8x8xbf16>, vector<2x8x8xf32> -> vector<2x8x8xf32>
    "tpu.trace_stop"() : () -> ()
    %77 = vector.shape_cast %76 : vector<2x8x8xf32> to vector<16x8xf32>
    %c0_24 = arith.constant 0 : index
    %c16 = arith.constant 16 : index
    %78 = vector.load %arg5[%c0_24, %c16] : memref<16x32xf32, #tpu.memory_space<vmem>>, vector<16x8xf32>
    tpu.vector_store %arg5[%c0_24, %c16], %77 {strides = array<i32>} : memref<16x32xf32, #tpu.memory_space<vmem>>, vector<16x8xf32>,
    %79 = vector.extract_strided_slice %22 {offsets = [0, 0, 24], sizes = [2, 8, 8], strides = [1, 1, 1]} : vector<2x8x32xbf16> to vector<2x8x8xbf16>
    %80 = vector.extract_strided_slice %23 {offsets = [0, 0, 24], sizes = [2, 8, 8], strides = [1, 1, 1]} : vector<2x8x32xbf16> to vector<2x8x8xbf16>
    %81 = vector.extract_strided_slice %24 {offsets = [0, 0, 24], sizes = [2, 8, 8], strides = [1, 1, 1]} : vector<2x8x32xbf16> to vector<2x8x8xbf16>
    "tpu.trace_start"() <{level = 10 : i32, message = "bnd,bmd->bnm"}> : () -> ()
    %cst_25 = arith.constant dense<0.000000e+00> : vector<2x8x8xf32>
    %82 = tpu.matmul %79, %80, %cst_25 {dimension_numbers = #tpu.dot_dimension_numbers<[2], [2], [1], [1], [0, 0, 0, 1, 1, 1], [0], [0]>} : vector<2x8x8xbf16>, vector<2x8x8xbf16>, vector<2x8x8xf32> -> vector<2x8x8xf32>
    "tpu.trace_stop"() : () -> ()
    %cst_26 = arith.constant dense<0xFF800000> : vector<2x8xf32>
    %83 = vector.multi_reduction <maximumf>, %82, %cst_26 [2] : vector<2x8x8xf32> to vector<2x8xf32>
    %84 = vector.shape_cast %83 : vector<2x8xf32> to vector<2x8x1xf32>
    %85 = vector.broadcast %84 : vector<2x8x1xf32> to vector<2x8x8xf32>
    %86 = arith.subf %82, %85 : vector<2x8x8xf32>
    %87 = math.exp %86 : vector<2x8x8xf32>
    %cst_27 = arith.constant dense<0.000000e+00> : vector<2x8xf32>
    %88 = vector.multi_reduction <add>, %87, %cst_27 [2] : vector<2x8x8xf32> to vector<2x8xf32>
    %89 = vector.shape_cast %88 : vector<2x8xf32> to vector<2x8x1xf32>
    %90 = tpu.reciprocal %89 {approx = true} : vector<2x8x1xf32> -> vector<2x8x1xf32>
    %91 = vector.broadcast %90 : vector<2x8x1xf32> to vector<2x8x8xf32>
    %92 = arith.mulf %87, %91 : vector<2x8x8xf32>
    %93 = arith.truncf %92 : vector<2x8x8xf32> to vector<2x8x8xbf16>
    "tpu.trace_start"() <{level = 10 : i32, message = "bnm,bmd->bnd"}> : () -> ()
    %cst_28 = arith.constant dense<0.000000e+00> : vector<2x8x8xf32>
    %94 = tpu.matmul %93, %81, %cst_28 {dimension_numbers = #tpu.dot_dimension_numbers<[2], [1], [1], [2], [0, 0, 0, 1, 1, 2], [0], [0]>} : vector<2x8x8xbf16>, vector<2x8x8xbf16>, vector<2x8x8xf32> -> vector<2x8x8xf32>
    "tpu.trace_stop"() : () -> ()
    %95 = vector.shape_cast %94 : vector<2x8x8xf32> to vector<16x8xf32>
    %c0_29 = arith.constant 0 : index
    %c24 = arith.constant 24 : index
    %96 = vector.load %arg5[%c0_29, %c24] : memref<16x32xf32, #tpu.memory_space<vmem>>, vector<16x8xf32>
    tpu.vector_store %arg5[%c0_29, %c24], %95 {strides = array<i32>} : memref<16x32xf32, #tpu.memory_space<vmem>>, vector<16x8xf32>,
    %c0_30 = arith.constant 0 : index
    %c0_31 = arith.constant 0 : index
    %97 = vector.load %arg5[%c0_30, %c0_31] : memref<16x32xf32, #tpu.memory_space<vmem>>, vector<16x32xf32>
    %98 = arith.truncf %97 : vector<16x32xf32> to vector<16x32xbf16>
    %c0_32 = arith.constant 0 : index
    %c0_33 = arith.constant 0 : index
    %99 = vector.load %arg3[%c0_32, %c0_33] : memref<32x32xbf16, #tpu.memory_space<vmem>>, vector<32x32xbf16>
    %cst_34 = arith.constant dense<0.000000e+00> : vector<16x32xf32>
    %100 = tpu.matmul %98, %99, %cst_34 {dimension_numbers = #tpu.dot_dimension_numbers<[1], [0], [0], [1], [0, 0, 1, 1], [], []>} : vector<16x32xbf16>, vector<32x32xbf16>, vector<16x32xf32> -> vector<16x32xf32>
    %c3 = arith.constant 3 : index
    %c0_35 = arith.constant 0 : index
    %101 = vector.load %arg2[%c3, %c0_35] : memref<4x32xf32, #tpu.memory_space<vmem>>, vector<1x32xf32>
    %102 = vector.broadcast %101 : vector<1x32xf32> to vector<16x32xf32>
    %103 = arith.addf %100, %102 : vector<16x32xf32>
    %c0_36 = arith.constant 0 : index
    %c0_37 = arith.constant 0 : index
    %104 = vector.load %arg4[%c0_36, %c0_37] : memref<16x32xf32, #tpu.memory_space<vmem>>, vector<16x32xf32>
    tpu.vector_store %arg4[%c0_36, %c0_37], %103 {strides = array<i32>} : memref<16x32xf32, #tpu.memory_space<vmem>>, vector<16x32xf32>,
    return
  }
}

</mosaic_0001>

<llo_original>
// kernel: tpu_custom_call.1
$region0: #{tpu_custom_call.1}
  #allocation0 [shape = 'u32[]', space=smem, size = 0x4, offset = 0x4, fixed_abs, tag = 'smem constant byte address 0x4 - core index']
  #allocation1 [shape = 'u32[144,128]{1,0:T(1,128)}', space=vmem, size = 0x12000, scoped, tag = 'internal scratch']
  #allocation2 [shape = 'f32[16,32]{1,0:T(8,128)}', space=vmem, size = 0x2000, scoped, tag = 'scratch operand']
  %s0 = inlined_call_operand.hbm [shape: f32[3,16,32], index: 0, kind: input, shape index: {}]
  %s1 = inlined_call_operand.hbm [shape: bf16[3,32,32], index: 1, kind: input, shape index: {}]
  %s2 = inlined_call_operand.vmem [shape: f32[4,32], index: 2, kind: input, shape index: {}]
  %s3 = inlined_call_operand.hbm [shape: bf16[32,32], index: 3, kind: input, shape index: {}]
  %s4 = inlined_call_operand.hbm [shape: f32[16,32], index: 4, kind: output, shape index: {}]
  %s5 = sld [smem:[#allocation0]]
  $region38: #{tpu_custom_call.1} parent=0
    _
  %s7 = ssub.s32 1, %s5
  %s8 = scalar_select 0, %s7, %s5
  $region1: #{tpu_custom_call.1} parent=0
    #allocation3 [shape = 'u8[24576]{0}', space=vmem, size = 0x6000, scoped, tag = 'input window, operand 0, single buffered']
    #allocation4 [shape = 's32[1]{0}', space=sflag, size = 0x4, scoped, tag = 'scoped memory for tpu_custom_call.1']
    #allocation5 [shape = 's32[1]{0}', space=sflag, size = 0x4, scoped, tag = 'scoped memory for tpu_custom_call.1']
    #allocation6 [shape = 'u8[24576]{0}', space=vmem, size = 0x6000, scoped, tag = 'input window, operand 1, single buffered']
    #allocation7 [shape = 's32[1]{0}', space=sflag, size = 0x4, scoped, tag = 'scoped memory for tpu_custom_call.1']
    #allocation8 [shape = 'u8[8192]{0}', space=vmem, size = 0x2000, scoped, tag = 'input window, operand 3, single buffered']
    #allocation9 [shape = 'u8[8192]{0}', space=vmem, size = 0x2000, scoped, tag = 'output window, operand 0, single buffered']
    %9 = vsyncpa [#allocation4], 0
    %10 = vsyncpa [#allocation7], 0
    %11 = vsyncpa [#allocation5], 0
    // Predicated region
    $region2: #{tpu_custom_call.1} parent=1 // pred_check
      _
    $region3: #{tpu_custom_call.1} parent=1 // pred_check_branch
      %13 = sbr.rel (0) target = $region5
    $region4: #{tpu_custom_call.1} parent=1 // pred_region
      %s15 = ssub.s32 768, 768
      %16 = vsyncadd [#allocation4], %s15
      %s17 = sshll.u32 [#allocation3], 4
      %s18 = int_to_ptr.vmem [resolvable:$true] %s17
      %23 = dma.hbm_to_vmem [thread:$0]  %s0, 768, %s18, [#allocation4], 128, 128, 8
    $region5: #{tpu_custom_call.1} parent=1 // pred_fallthru
      _
    // Predicated region
    $region6: #{tpu_custom_call.1} parent=1 // pred_check
      _
    $region7: #{tpu_custom_call.1} parent=1 // pred_check_branch
      %25 = sbr.rel (0) target = $region9
    $region8: #{tpu_custom_call.1} parent=1 // pred_region
      %s27 = ssub.s32 768, 768
      %28 = vsyncadd [#allocation7], %s27
      %s29 = sshll.u32 [#allocation6], 4
      %s30 = int_to_ptr.vmem [resolvable:$true] %s29
      %35 = dma.hbm_to_vmem [thread:$0]  %s1, 768, %s30, [#allocation7], 64, 64, 4
    $region9: #{tpu_custom_call.1} parent=1 // pred_fallthru
      _
    // Predicated region
    $region10: #{tpu_custom_call.1} parent=1 // pred_check
      _
    $region11: #{tpu_custom_call.1} parent=1 // pred_check_branch
      %37 = sbr.rel (0) target = $region13
    $region12: #{tpu_custom_call.1} parent=1 // pred_region
      _
    $region13: #{tpu_custom_call.1} parent=1 // pred_fallthru
      _
    // Predicated region
    $region14: #{tpu_custom_call.1} parent=1 // pred_check
      _
    $region15: #{tpu_custom_call.1} parent=1 // pred_check_branch
      %39 = sbr.rel (0) target = $region17
    $region16: #{tpu_custom_call.1} parent=1 // pred_region
      %s41 = ssub.s32 256, 256
      %42 = vsyncadd [#allocation7], %s41
      %s43 = sshll.u32 [#allocation8], 4
      %s44 = int_to_ptr.vmem [resolvable:$true] %s43
      %49 = dma.hbm_to_vmem [thread:$0]  %s3, 256, %s44, [#allocation7], 64, 64, 4
    $region17: #{tpu_custom_call.1} parent=1 // pred_fallthru
      _
    // Predicated region
    $region18: #{tpu_custom_call.1} parent=1 // pred_check
      _
    $region19: #{tpu_custom_call.1} parent=1 // pred_check_branch
      %51 = sbr.rel (0) target = $region21
    $region20: #{tpu_custom_call.1} parent=1 // pred_region
      %52 = dma.done [#allocation4], 768
    $region21: #{tpu_custom_call.1} parent=1 // pred_fallthru
      _
    // Predicated region
    $region22: #{tpu_custom_call.1} parent=1 // pred_check
      _
    $region23: #{tpu_custom_call.1} parent=1 // pred_check_branch
      %54 = sbr.rel (0) target = $region25
    $region24: #{tpu_custom_call.1} parent=1 // pred_region
      %55 = dma.done [#allocation7], 768
    $region25: #{tpu_custom_call.1} parent=1 // pred_fallthru
      _
    // Predicated region
    $region26: #{tpu_custom_call.1} parent=1 // pred_check
      _
    $region27: #{tpu_custom_call.1} parent=1 // pred_check_branch
      %57 = sbr.rel (0) target = $region29
    $region28: #{tpu_custom_call.1} parent=1 // pred_region
      %58 = dma.done [#allocation7], 256
    $region29: #{tpu_custom_call.1} parent=1 // pred_fallthru
      _
    %v60 = vld [vmem:[#allocation3] sm:$0xff]
    %v61 = vld [vmem:[#allocation3 + $0x8] sm:$0xff]
    %v62 = vld [vmem:[#allocation3 + $0x10] sm:$0xff]
    %v63 = vld [vmem:[#allocation3 + $0x18] sm:$0xff]
    %v64 = vld [vmem:[#allocation3 + $0x20] sm:$0xff]
    %v65 = vld [vmem:[#allocation3 + $0x28] sm:$0xff]
    %v66 = vpack.c.bf16 %v61, %v60
    %v67 = vpack.c.bf16 %v63, %v62
    %v68 = vpack.c.bf16 %v65, %v64
    %v69 = vld [vmem:[#allocation6] sm:$0xf]
    %v70 = vld [vmem:[#allocation6 + $0x4] sm:$0xf]
    %v71 = vld [vmem:[#allocation6 + $0x8] sm:$0xf]
    %v72 = vld [vmem:[#allocation6 + $0xc] sm:$0xf]
    %v73 = vld [vmem:[#allocation6 + $0x10] sm:$0xf]
    %v74 = vld [vmem:[#allocation6 + $0x14] sm:$0xf]
    %v75 = vld [vmem:[#allocation6 + $0x18] sm:$0xf]
    %v76 = vld [vmem:[#allocation6 + $0x1c] sm:$0xf]
    %v77 = vld [vmem:[#allocation6 + $0x20] sm:$0xf]
    %v78 = vld [vmem:[#allocation6 + $0x24] sm:$0xf]
    %v79 = vld [vmem:[#allocation6 + $0x28] sm:$0xf]
    %v80 = vld [vmem:[#allocation6 + $0x2c] sm:$0xf]
    %v85 = vunpack.c.l.b16 %v69
    %v86 = vunpack.c.l.b16 %v70
    %v87 = vunpack.c.l.b16 %v71
    %v88 = vunpack.c.l.b16 %v72
    %v89 = vpack.c.b16 %v86, %v85
    %v90 = vpack.c.b16 %v88, %v87
    %vm93 = vcmask 261120
    %v95 = vsel %vm93, %v66, 0
    %97 = vmatprep.subr.bf16.mxu0 0
    %98 = vmatpush1.bf16.msra.mxu0 %v89
    %99 = vmatprep.subr.bf16.mxu0 0
    %100 = vmatpush1.bf16.msra.mxu0 %v90
    %101 = vmatprep.subr.bf16.mxu0 0
    %102 = vmatpush1.bf16.msra.mxu0 0
    %103 = vmatprep.subr.bf16.mxu0 0
    %104 = vmatpush1.bf16.msra.mxu0 0
    %105 = vmatprep.subr.bf16.mxu0 0
    %106 = vmatpush1.bf16.msra.mxu0 0
    %107 = vmatprep.subr.bf16.mxu0 0
    %108 = vmatpush1.bf16.msra.mxu0 0
    %109 = vmatprep.subr.bf16.mxu0 0
    %110 = vmatpush1.bf16.msra.mxu0 0
    %111 = vmatprep.subr.bf16.mxu0 0
    %112 = vmatpush1.bf16.msra.mxu0 0
    %113 = vmatprep.subr.bf16.mxu0 0
    %114 = vmatpush1.bf16.msra.mxu0 0
    %115 = vmatprep.subr.bf16.mxu0 0
    %116 = vmatpush1.bf16.msra.mxu0 0
    %117 = vmatprep.subr.bf16.mxu0 0
    %118 = vmatpush1.bf16.msra.mxu0 0
    %119 = vmatprep.subr.bf16.mxu0 0
    %120 = vmatpush1.bf16.msra.mxu0 0
    %121 = vmatprep.subr.bf16.mxu0 0
    %122 = vmatpush1.bf16.msra.mxu0 0
    %123 = vmatprep.subr.bf16.mxu0 0
    %124 = vmatpush1.bf16.msra.mxu0 0
    %125 = vmatprep.subr.bf16.mxu0 0
    %126 = vmatpush1.bf16.msra.mxu0 0
    %127 = vmatprep.subr.bf16.mxu0 0
    %128 = vmatpush1.bf16.msra.mxu0 0
    %129 = vmatprep.mubr.bf16.mxu0 0
    %130 = vmatmul.mubr.bf16.gmra.mrb[0].mxu0 %v95
    %v131 = vpop.f32.mrb[0].mxu0
    %v132 = vadd.f32 0.0, %v131
    %v133 = vpop.f32.mrb[0].mxu0
    %v134 = vpop.f32.mrb[0].mxu0
    %v135 = vadd.f32 0.0, %v134
    %v136 = vpop.f32.mrb[0].mxu0
    %137 = vdwg.mxu0
    %v142 = vunpack.c.l.b16 %v73
    %v143 = vunpack.c.l.b16 %v74
    %v144 = vunpack.c.l.b16 %v75
    %v145 = vunpack.c.l.b16 %v76
    %v146 = vpack.c.b16 %v143, %v142
    %v147 = vpack.c.b16 %v145, %v144
    %v151 = vsel %vm93, %v67, 0
    %153 = vmatprep.subr.bf16.mxu0 0
    %154 = vmatpush1.bf16.msra.mxu0 %v146
    %155 = vmatprep.subr.bf16.mxu0 0
    %156 = vmatpush1.bf16.msra.mxu0 %v147
    %157 = vmatprep.subr.bf16.mxu0 0
    %158 = vmatpush1.bf16.msra.mxu0 0
    %159 = vmatprep.subr.bf16.mxu0 0
    %160 = vmatpush1.bf16.msra.mxu0 0
    %161 = vmatprep.subr.bf16.mxu0 0
    %162 = vmatpush1.bf16.msra.mxu0 0
    %163 = vmatprep.subr.bf16.mxu0 0
    %164 = vmatpush1.bf16.msra.mxu0 0
    %165 = vmatprep.subr.bf16.mxu0 0
    %166 = vmatpush1.bf16.msra.mxu0 0
    %167 = vmatprep.subr.bf16.mxu0 0
    %168 = vmatpush1.bf16.msra.mxu0 0
    %169 = vmatprep.subr.bf16.mxu0 0
    %170 = vmatpush1.bf16.msra.mxu0 0
    %171 = vmatprep.subr.bf16.mxu0 0
    %172 = vmatpush1.bf16.msra.mxu0 0
    %173 = vmatprep.subr.bf16.mxu0 0
    %174 = vmatpush1.bf16.msra.mxu0 0
    %175 = vmatprep.subr.bf16.mxu0 0
    %176 = vmatpush1.bf16.msra.mxu0 0
    %177 = vmatprep.subr.bf16.mxu0 0
    %178 = vmatpush1.bf16.msra.mxu0 0
    %179 = vmatprep.subr.bf16.mxu0 0
    %180 = vmatpush1.bf16.msra.mxu0 0
    %181 = vmatprep.subr.bf16.mxu0 0
    %182 = vmatpush1.bf16.msra.mxu0 0
    %183 = vmatprep.subr.bf16.mxu0 0
    %184 = vmatpush1.bf16.msra.mxu0 0
    %185 = vmatprep.mubr.bf16.mxu0 0
    %186 = vmatmul.mubr.bf16.gmra.mrb[0].mxu0 %v151
    %v187 = vpop.f32.mrb[0].mxu0
    %v188 = vadd.f32 0.0, %v187
    %v189 = vpop.f32.mrb[0].mxu0
    %v190 = vpop.f32.mrb[0].mxu0
    %v191 = vadd.f32 0.0, %v190
    %v192 = vpop.f32.mrb[0].mxu0
    %193 = vdwg.mxu0
    %v198 = vunpack.c.l.b16 %v77
    %v199 = vunpack.c.l.b16 %v78
    %v200 = vunpack.c.l.b16 %v79
    %v201 = vunpack.c.l.b16 %v80
    %v202 = vpack.c.b16 %v199, %v198
    %v203 = vpack.c.b16 %v201, %v200
    %v207 = vsel %vm93, %v68, 0
    %209 = vmatprep.subr.bf16.mxu0 0
    %210 = vmatpush1.bf16.msra.mxu0 %v202
    %211 = vmatprep.subr.bf16.mxu0 0
    %212 = vmatpush1.bf16.msra.mxu0 %v203
    %213 = vmatprep.subr.bf16.mxu0 0
    %214 = vmatpush1.bf16.msra.mxu0 0
    %215 = vmatprep.subr.bf16.mxu0 0
    %216 = vmatpush1.bf16.msra.mxu0 0
    %217 = vmatprep.subr.bf16.mxu0 0
    %218 = vmatpush1.bf16.msra.mxu0 0
    %219 = vmatprep.subr.bf16.mxu0 0
    %220 = vmatpush1.bf16.msra.mxu0 0
    %221 = vmatprep.subr.bf16.mxu0 0
    %222 = vmatpush1.bf16.msra.mxu0 0
    %223 = vmatprep.subr.bf16.mxu0 0
    %224 = vmatpush1.bf16.msra.mxu0 0
    %225 = vmatprep.subr.bf16.mxu0 0
    %226 = vmatpush1.bf16.msra.mxu0 0
    %227 = vmatprep.subr.bf16.mxu0 0
    %228 = vmatpush1.bf16.msra.mxu0 0
    %229 = vmatprep.subr.bf16.mxu0 0
    %230 = vmatpush1.bf16.msra.mxu0 0
    %231 = vmatprep.subr.bf16.mxu0 0
    %232 = vmatpush1.bf16.msra.mxu0 0
    %233 = vmatprep.subr.bf16.mxu0 0
    %234 = vmatpush1.bf16.msra.mxu0 0
    %235 = vmatprep.subr.bf16.mxu0 0
    %236 = vmatpush1.bf16.msra.mxu0 0
    %237 = vmatprep.subr.bf16.mxu0 0
    %238 = vmatpush1.bf16.msra.mxu0 0
    %239 = vmatprep.subr.bf16.mxu0 0
    %240 = vmatpush1.bf16.msra.mxu0 0
    %241 = vmatprep.mubr.bf16.mxu0 0
    %242 = vmatmul.mubr.bf16.gmra.mrb[0].mxu0 %v207
    %v243 = vpop.f32.mrb[0].mxu0
    %v244 = vadd.f32 0.0, %v243
    %v245 = vpop.f32.mrb[0].mxu0
    %v246 = vpop.f32.mrb[0].mxu0
    %v247 = vadd.f32 0.0, %v246
    %v248 = vpop.f32.mrb[0].mxu0
    %249 = vdwg.mxu0
    %v250 = vld [vmem:[%s2] sm:$0x1]
    %v251 = vlaneseq
    %v252 = vshrl.u32 %v251, 7
    %v253 = vsub.s32 0, %v252
    %v254 = vrot.slane %v250, %v253
    %v255 = vadd.f32 %v132, %v254
    %v256 = vadd.f32 %v135, %v254
    %v257 = vld [vmem:[%s2 + $0x1] sm:$0x1]
    %v258 = vlaneseq
    %v259 = vshrl.u32 %v258, 7
    %v260 = vsub.s32 0, %v259
    %v261 = vrot.slane %v257, %v260
    %v262 = vadd.f32 %v188, %v261
    %v263 = vadd.f32 %v191, %v261
    %v264 = vld [vmem:[%s2 + $0x2] sm:$0x1]
    %v265 = vlaneseq
    %v266 = vshrl.u32 %v265, 7
    %v267 = vsub.s32 0, %v266
    %v268 = vrot.slane %v264, %v267
    %v269 = vadd.f32 %v244, %v268
    %v270 = vadd.f32 %v247, %v268
    %v271 = vpack.c.bf16 %v255, %v255
    %v272 = vpack.c.bf16 %v256, %v256
    %v273 = vpack.c.bf16 %v262, %v262
    %v274 = vpack.c.bf16 %v263, %v263
    %v275 = vpack.c.bf16 %v269, %v269
    %v276 = vpack.c.bf16 %v270, %v270
    %vm277 = vcmask 64512
    %v279 = vsel %vm277, %v271, 0
    %v282 = vsel %vm277, %v273, 0
    %284 = vmatprep.subr.bf16.mxu0 0
    %285 = vmatpush1.bf16.xpose.msra.mxu0 %v282
    %286 = vmatprep.subr.bf16.mxu0 0
    %287 = vmatpush1.bf16.xpose.msra.mxu0 0
    %288 = vmatprep.subr.bf16.mxu0 0
    %289 = vmatpush1.bf16.xpose.msra.mxu0 0
    %290 = vmatprep.subr.bf16.mxu0 0
    %291 = vmatpush1.bf16.xpose.msra.mxu0 0
    %292 = vmatprep.subr.bf16.mxu0 0
    %293 = vmatpush1.bf16.xpose.msra.mxu0 0
    %294 = vmatprep.subr.bf16.mxu0 0
    %295 = vmatpush1.bf16.xpose.msra.mxu0 0
    %296 = vmatprep.subr.bf16.mxu0 0
    %297 = vmatpush1.bf16.xpose.msra.mxu0 0
    %298 = vmatprep.subr.bf16.mxu0 0
    %299 = vmatpush1.bf16.xpose.msra.mxu0 0
    %300 = vmatprep.subr.bf16.mxu0 0
    %301 = vmatpush1.bf16.xpose.msra.mxu0 0
    %302 = vmatprep.subr.bf16.mxu0 0
    %303 = vmatpush1.bf16.xpose.msra.mxu0 0
    %304 = vmatprep.subr.bf16.mxu0 0
    %305 = vmatpush1.bf16.xpose.msra.mxu0 0
    %306 = vmatprep.subr.bf16.mxu0 0
    %307 = vmatpush1.bf16.xpose.msra.mxu0 0
    %308 = vmatprep.subr.bf16.mxu0 0
    %309 = vmatpush1.bf16.xpose.msra.mxu0 0
    %310 = vmatprep.subr.bf16.mxu0 0
    %311 = vmatpush1.bf16.xpose.msra.mxu0 0
    %312 = vmatprep.subr.bf16.mxu0 0
    %313 = vmatpush1.bf16.xpose.msra.mxu0 0
    %314 = vmatprep.subr.bf16.mxu0 0
    %315 = vmatpush1.bf16.xpose.msra.mxu0 0
    %316 = vmatprep.mubr.bf16.mxu0 0
    %317 = vmatmul.mubr.bf16.gmra.mrb[0].mxu0 %v279
    %v318 = vpop.f32.mrb[0].mxu0
    %v319 = vadd.f32 0.0, %v318
    %v320 = vpop.f32.mrb[0].mxu0
    %v321 = vpop.f32.mrb[0].mxu0
    %v322 = vpop.f32.mrb[0].mxu0
    %323 = vdwg.mxu0
    %v325 = vsel %vm277, %v272, 0
    %v328 = vsel %vm277, %v274, 0
    %330 = vmatprep.subr.bf16.mxu0 0
    %331 = vmatpush1.bf16.xpose.msra.mxu0 %v328
    %332 = vmatprep.subr.bf16.mxu0 0
    %333 = vmatpush1.bf16.xpose.msra.mxu0 0
    %334 = vmatprep.subr.bf16.mxu0 0
    %335 = vmatpush1.bf16.xpose.msra.mxu0 0
    %336 = vmatprep.subr.bf16.mxu0 0
    %337 = vmatpush1.bf16.xpose.msra.mxu0 0
    %338 = vmatprep.subr.bf16.mxu0 0
    %339 = vmatpush1.bf16.xpose.msra.mxu0 0
    %340 = vmatprep.subr.bf16.mxu0 0
    %341 = vmatpush1.bf16.xpose.msra.mxu0 0
    %342 = vmatprep.subr.bf16.mxu0 0
    %343 = vmatpush1.bf16.xpose.msra.mxu0 0
    %344 = vmatprep.subr.bf16.mxu0 0
    %345 = vmatpush1.bf16.xpose.msra.mxu0 0
    %346 = vmatprep.subr.bf16.mxu0 0
    %347 = vmatpush1.bf16.xpose.msra.mxu0 0
    %348 = vmatprep.subr.bf16.mxu0 0
    %349 = vmatpush1.bf16.xpose.msra.mxu0 0
    %350 = vmatprep.subr.bf16.mxu0 0
    %351 = vmatpush1.bf16.xpose.msra.mxu0 0
    %352 = vmatprep.subr.bf16.mxu0 0
    %353 = vmatpush1.bf16.xpose.msra.mxu0 0
    %354 = vmatprep.subr.bf16.mxu0 0
    %355 = vmatpush1.bf16.xpose.msra.mxu0 0
    %356 = vmatprep.subr.bf16.mxu0 0
    %357 = vmatpush1.bf16.xpose.msra.mxu0 0
    %358 = vmatprep.subr.bf16.mxu0 0
    %359 = vmatpush1.bf16.xpose.msra.mxu0 0
    %360 = vmatprep.subr.bf16.mxu0 0
    %361 = vmatpush1.bf16.xpose.msra.mxu0 0
    %362 = vmatprep.mubr.bf16.mxu0 0
    %363 = vmatmul.mubr.bf16.gmra.mrb[0].mxu0 %v325
    %v364 = vpop.f32.mrb[0].mxu0
    %v365 = vadd.f32 0.0, %v364
    %v366 = vpop.f32.mrb[0].mxu0
    %v367 = vpop.f32.mrb[0].mxu0
    %v368 = vpop.f32.mrb[0].mxu0
    %369 = vdwg.mxu0
    %v370 = vsel %vm277, %v319, -inf
    %371 = vmax.xlane.f32.xlu0 %v370
    %v372 = vpop.xlane.xlu0 %371
    %v373 = vsel %vm277, %v365, -inf
    %374 = vmax.xlane.f32.xlu0 %v373
    %v375 = vpop.xlane.xlu0 %374
    %v376 = vsub.f32 %v319, %v372
    %v377 = vsub.f32 %v365, %v375
    %v378 = vmul.f32 %v376, 1.442695
    %v379 = vpow.pop %v378
    %v380 = vmul.f32 %v377, 1.442695
    %v381 = vpow.pop %v380
    %v382 = vsel %vm277, %v379, 0.0
    %383 = vadd.xlane.f32.xlu0 %v382
    %v384 = vpop.xlane.xlu0 %383
    %v385 = vsel %vm277, %v381, 0.0
    %386 = vadd.xlane.f32.xlu0 %v385
    %v387 = vpop.xlane.xlu0 %386
    %v388 = vrcp.pop %v384
    %v389 = vrcp.pop %v387
    %v390 = vmul.f32 %v379, %v388
    %v391 = vmul.f32 %v381, %v389
    %v392 = vpack.c.bf16 %v390, %v390
    %v393 = vpack.c.bf16 %v391, %v391
    %v395 = vsel %vm277, %v392, 0
    %vm397 = vcmask 1043456
    %v399 = vsel %vm397, %v275, 0
    %401 = vmatprep.subr.bf16.mxu0 0
    %402 = vmatpush1.bf16.msra.mxu0 %v399
    %403 = vmatprep.subr.bf16.mxu0 0
    %404 = vmatpush1.bf16.msra.mxu0 0
    %405 = vmatprep.subr.bf16.mxu0 0
    %406 = vmatpush1.bf16.msra.mxu0 0
    %407 = vmatprep.subr.bf16.mxu0 0
    %408 = vmatpush1.bf16.msra.mxu0 0
    %409 = vmatprep.subr.bf16.mxu0 0
    %410 = vmatpush1.bf16.msra.mxu0 0
    %411 = vmatprep.subr.bf16.mxu0 0
    %412 = vmatpush1.bf16.msra.mxu0 0
    %413 = vmatprep.subr.bf16.mxu0 0
    %414 = vmatpush1.bf16.msra.mxu0 0
    %415 = vmatprep.subr.bf16.mxu0 0
    %416 = vmatpush1.bf16.msra.mxu0 0
    %417 = vmatprep.subr.bf16.mxu0 0
    %418 = vmatpush1.bf16.msra.mxu0 0
    %419 = vmatprep.subr.bf16.mxu0 0
    %420 = vmatpush1.bf16.msra.mxu0 0
    %421 = vmatprep.subr.bf16.mxu0 0
    %422 = vmatpush1.bf16.msra.mxu0 0
    %423 = vmatprep.subr.bf16.mxu0 0
    %424 = vmatpush1.bf16.msra.mxu0 0
    %425 = vmatprep.subr.bf16.mxu0 0
    %426 = vmatpush1.bf16.msra.mxu0 0
    %427 = vmatprep.subr.bf16.mxu0 0
    %428 = vmatpush1.bf16.msra.mxu0 0
    %429 = vmatprep.subr.bf16.mxu0 0
    %430 = vmatpush1.bf16.msra.mxu0 0
    %431 = vmatprep.subr.bf16.mxu0 0
    %432 = vmatpush1.bf16.msra.mxu0 0
    %433 = vmatprep.mubr.bf16.mxu0 0
    %434 = vmatmul.mubr.bf16.gmra.mrb[0].mxu0 %v395
    %v435 = vpop.f32.mrb[0].mxu0
    %v436 = vadd.f32 0.0, %v435
    %v437 = vpop.f32.mrb[0].mxu0
    %v438 = vpop.f32.mrb[0].mxu0
    %v439 = vpop.f32.mrb[0].mxu0
    %440 = vdwg.mxu0
    %v442 = vsel %vm277, %v393, 0
    %v445 = vsel %vm397, %v276, 0
    %447 = vmatprep.subr.bf16.mxu0 0
    %448 = vmatpush1.bf16.msra.mxu0 %v445
    %449 = vmatprep.subr.bf16.mxu0 0
    %450 = vmatpush1.bf16.msra.mxu0 0
    %451 = vmatprep.subr.bf16.mxu0 0
    %452 = vmatpush1.bf16.msra.mxu0 0
    %453 = vmatprep.subr.bf16.mxu0 0
    %454 = vmatpush1.bf16.msra.mxu0 0
    %455 = vmatprep.subr.bf16.mxu0 0
    %456 = vmatpush1.bf16.msra.mxu0 0
    %457 = vmatprep.subr.bf16.mxu0 0
    %458 = vmatpush1.bf16.msra.mxu0 0
    %459 = vmatprep.subr.bf16.mxu0 0
    %460 = vmatpush1.bf16.msra.mxu0 0
    %461 = vmatprep.subr.bf16.mxu0 0
    %462 = vmatpush1.bf16.msra.mxu0 0
    %463 = vmatprep.subr.bf16.mxu0 0
    %464 = vmatpush1.bf16.msra.mxu0 0
    %465 = vmatprep.subr.bf16.mxu0 0
    %466 = vmatpush1.bf16.msra.mxu0 0
    %467 = vmatprep.subr.bf16.mxu0 0
    %468 = vmatpush1.bf16.msra.mxu0 0
    %469 = vmatprep.subr.bf16.mxu0 0
    %470 = vmatpush1.bf16.msra.mxu0 0
    %471 = vmatprep.subr.bf16.mxu0 0
    %472 = vmatpush1.bf16.msra.mxu0 0
    %473 = vmatprep.subr.bf16.mxu0 0
    %474 = vmatpush1.bf16.msra.mxu0 0
    %475 = vmatprep.subr.bf16.mxu0 0
    %476 = vmatpush1.bf16.msra.mxu0 0
    %477 = vmatprep.subr.bf16.mxu0 0
    %478 = vmatpush1.bf16.msra.mxu0 0
    %479 = vmatprep.mubr.bf16.mxu0 0
    %480 = vmatmul.mubr.bf16.gmra.mrb[0].mxu0 %v442
    %v481 = vpop.f32.mrb[0].mxu0
    %v482 = vadd.f32 0.0, %v481
    %v483 = vpop.f32.mrb[0].mxu0
    %v484 = vpop.f32.mrb[0].mxu0
    %v485 = vpop.f32.mrb[0].mxu0
    %486 = vdwg.mxu0
    %487 = vst.msk [vmem:[#allocation2] sm:$0xff] %vm277, %v436
    %488 = vst.msk [vmem:[#allocation2 + $0x8] sm:$0xff] %vm277, %v482
    %490 = vrot.lane.b32.xlu0 %v271, 120
    %v491 = vpop.permute.xlu0 %490
    %493 = vrot.lane.b32.xlu0 %v273, 120
    %v494 = vpop.permute.xlu0 %493
    %v496 = vsel %vm277, %v491, 0
    %v499 = vsel %vm277, %v494, 0
    %501 = vmatprep.subr.bf16.mxu0 0
    %502 = vmatpush1.bf16.xpose.msra.mxu0 %v499
    %503 = vmatprep.subr.bf16.mxu0 0
    %504 = vmatpush1.bf16.xpose.msra.mxu0 0
    %505 = vmatprep.subr.bf16.mxu0 0
    %506 = vmatpush1.bf16.xpose.msra.mxu0 0
    %507 = vmatprep.subr.bf16.mxu0 0
    %508 = vmatpush1.bf16.xpose.msra.mxu0 0
    %509 = vmatprep.subr.bf16.mxu0 0
    %510 = vmatpush1.bf16.xpose.msra.mxu0 0
    %511 = vmatprep.subr.bf16.mxu0 0
    %512 = vmatpush1.bf16.xpose.msra.mxu0 0
    %513 = vmatprep.subr.bf16.mxu0 0
    %514 = vmatpush1.bf16.xpose.msra.mxu0 0
    %515 = vmatprep.subr.bf16.mxu0 0
    %516 = vmatpush1.bf16.xpose.msra.mxu0 0
    %517 = vmatprep.subr.bf16.mxu0 0
    %518 = vmatpush1.bf16.xpose.msra.mxu0 0
    %519 = vmatprep.subr.bf16.mxu0 0
    %520 = vmatpush1.bf16.xpose.msra.mxu0 0
    %521 = vmatprep.subr.bf16.mxu0 0
    %522 = vmatpush1.bf16.xpose.msra.mxu0 0
    %523 = vmatprep.subr.bf16.mxu0 0
    %524 = vmatpush1.bf16.xpose.msra.mxu0 0
    %525 = vmatprep.subr.bf16.mxu0 0
    %526 = vmatpush1.bf16.xpose.msra.mxu0 0
    %527 = vmatprep.subr.bf16.mxu0 0
    %528 = vmatpush1.bf16.xpose.msra.mxu0 0
    %529 = vmatprep.subr.bf16.mxu0 0
    %530 = vmatpush1.bf16.xpose.msra.mxu0 0
    %531 = vmatprep.subr.bf16.mxu0 0
    %532 = vmatpush1.bf16.xpose.msra.mxu0 0
    %533 = vmatprep.mubr.bf16.mxu0 0
    %534 = vmatmul.mubr.bf16.gmra.mrb[0].mxu0 %v496
    %v535 = vpop.f32.mrb[0].mxu0
    %v536 = vadd.f32 0.0, %v535
    %v537 = vpop.f32.mrb[0].mxu0
    %v538 = vpop.f32.mrb[0].mxu0
    %v539 = vpop.f32.mrb[0].mxu0
    %540 = vdwg.mxu0
    %542 = vrot.lane.b32.xlu0 %v272, 120
    %v543 = vpop.permute.xlu0 %542
    %545 = vrot.lane.b32.xlu0 %v274, 120
    %v546 = vpop.permute.xlu0 %545
    %v548 = vsel %vm277, %v543, 0
    %v551 = vsel %vm277, %v546, 0
    %553 = vmatprep.subr.bf16.mxu0 0
    %554 = vmatpush1.bf16.xpose.msra.mxu0 %v551
    %555 = vmatprep.subr.bf16.mxu0 0
    %556 = vmatpush1.bf16.xpose.msra.mxu0 0
    %557 = vmatprep.subr.bf16.mxu0 0
    %558 = vmatpush1.bf16.xpose.msra.mxu0 0
    %559 = vmatprep.subr.bf16.mxu0 0
    %560 = vmatpush1.bf16.xpose.msra.mxu0 0
    %561 = vmatprep.subr.bf16.mxu0 0
    %562 = vmatpush1.bf16.xpose.msra.mxu0 0
    %563 = vmatprep.subr.bf16.mxu0 0
    %564 = vmatpush1.bf16.xpose.msra.mxu0 0
    %565 = vmatprep.subr.bf16.mxu0 0
    %566 = vmatpush1.bf16.xpose.msra.mxu0 0
    %567 = vmatprep.subr.bf16.mxu0 0
    %568 = vmatpush1.bf16.xpose.msra.mxu0 0
    %569 = vmatprep.subr.bf16.mxu0 0
    %570 = vmatpush1.bf16.xpose.msra.mxu0 0
    %571 = vmatprep.subr.bf16.mxu0 0
    %572 = vmatpush1.bf16.xpose.msra.mxu0 0
    %573 = vmatprep.subr.bf16.mxu0 0
    %574 = vmatpush1.bf16.xpose.msra.mxu0 0
    %575 = vmatprep.subr.bf16.mxu0 0
    %576 = vmatpush1.bf16.xpose.msra.mxu0 0
    %577 = vmatprep.subr.bf16.mxu0 0
    %578 = vmatpush1.bf16.xpose.msra.mxu0 0
    %579 = vmatprep.subr.bf16.mxu0 0
    %580 = vmatpush1.bf16.xpose.msra.mxu0 0
    %581 = vmatprep.subr.bf16.mxu0 0
    %582 = vmatpush1.bf16.xpose.msra.mxu0 0
    %583 = vmatprep.subr.bf16.mxu0 0
    %584 = vmatpush1.bf16.xpose.msra.mxu0 0
    %585 = vmatprep.mubr.bf16.mxu0 0
    %586 = vmatmul.mubr.bf16.gmra.mrb[0].mxu0 %v548
    %v587 = vpop.f32.mrb[0].mxu0
    %v588 = vadd.f32 0.0, %v587
    %v589 = vpop.f32.mrb[0].mxu0
    %v590 = vpop.f32.mrb[0].mxu0
    %v591 = vpop.f32.mrb[0].mxu0
    %592 = vdwg.mxu0
    %v593 = vsel %vm277, %v536, -inf
    %594 = vmax.xlane.f32.xlu0 %v593
    %v595 = vpop.xlane.xlu0 %594
    %v596 = vsel %vm277, %v588, -inf
    %597 = vmax.xlane.f32.xlu0 %v596
    %v598 = vpop.xlane.xlu0 %597
    %v599 = vsub.f32 %v536, %v595
    %v600 = vsub.f32 %v588, %v598
    %v601 = vmul.f32 %v599, 1.442695
    %v602 = vpow.pop %v601
    %v603 = vmul.f32 %v600, 1.442695
    %v604 = vpow.pop %v603
    %v605 = vsel %vm277, %v602, 0.0
    %606 = vadd.xlane.f32.xlu0 %v605
    %v607 = vpop.xlane.xlu0 %606
    %v608 = vsel %vm277, %v604, 0.0
    %609 = vadd.xlane.f32.xlu0 %v608
    %v610 = vpop.xlane.xlu0 %609
    %v611 = vrcp.pop %v607
    %v612 = vrcp.pop %v610
    %v613 = vmul.f32 %v602, %v611
    %v614 = vmul.f32 %v604, %v612
    %v615 = vpack.c.bf16 %v613, %v613
    %v616 = vpack.c.bf16 %v614, %v614
    %618 = vrot.lane.b32.xlu0 %v275, 120
    %v619 = vpop.permute.xlu0 %618
    %v621 = vsel %vm277, %v615, 0
    %v624 = vsel %vm397, %v619, 0
    %626 = vmatprep.subr.bf16.mxu0 0
    %627 = vmatpush1.bf16.msra.mxu0 %v624
    %628 = vmatprep.subr.bf16.mxu0 0
    %629 = vmatpush1.bf16.msra.mxu0 0
    %630 = vmatprep.subr.bf16.mxu0 0
    %631 = vmatpush1.bf16.msra.mxu0 0
    %632 = vmatprep.subr.bf16.mxu0 0
    %633 = vmatpush1.bf16.msra.mxu0 0
    %634 = vmatprep.subr.bf16.mxu0 0
    %635 = vmatpush1.bf16.msra.mxu0 0
    %636 = vmatprep.subr.bf16.mxu0 0
    %637 = vmatpush1.bf16.msra.mxu0 0
    %638 = vmatprep.subr.bf16.mxu0 0
    %639 = vmatpush1.bf16.msra.mxu0 0
    %640 = vmatprep.subr.bf16.mxu0 0
    %641 = vmatpush1.bf16.msra.mxu0 0
    %642 = vmatprep.subr.bf16.mxu0 0
    %643 = vmatpush1.bf16.msra.mxu0 0
    %644 = vmatprep.subr.bf16.mxu0 0
    %645 = vmatpush1.bf16.msra.mxu0 0
    %646 = vmatprep.subr.bf16.mxu0 0
    %647 = vmatpush1.bf16.msra.mxu0 0
    %648 = vmatprep.subr.bf16.mxu0 0
    %649 = vmatpush1.bf16.msra.mxu0 0
    %650 = vmatprep.subr.bf16.mxu0 0
    %651 = vmatpush1.bf16.msra.mxu0 0
    %652 = vmatprep.subr.bf16.mxu0 0
    %653 = vmatpush1.bf16.msra.mxu0 0
    %654 = vmatprep.subr.bf16.mxu0 0
    %655 = vmatpush1.bf16.msra.mxu0 0
    %656 = vmatprep.subr.bf16.mxu0 0
    %657 = vmatpush1.bf16.msra.mxu0 0
    %658 = vmatprep.mubr.bf16.mxu0 0
    %659 = vmatmul.mubr.bf16.gmra.mrb[0].mxu0 %v621
    %v660 = vpop.f32.mrb[0].mxu0
    %v661 = vadd.f32 0.0, %v660
    %v662 = vpop.f32.mrb[0].mxu0
    %v663 = vpop.f32.mrb[0].mxu0
    %v664 = vpop.f32.mrb[0].mxu0
    %665 = vdwg.mxu0
    %667 = vrot.lane.b32.xlu0 %v276, 120
    %v668 = vpop.permute.xlu0 %667
    %v670 = vsel %vm277, %v616, 0
    %v673 = vsel %vm397, %v668, 0
    %675 = vmatprep.subr.bf16.mxu0 0
    %676 = vmatpush1.bf16.msra.mxu0 %v673
    %677 = vmatprep.subr.bf16.mxu0 0
    %678 = vmatpush1.bf16.msra.mxu0 0
    %679 = vmatprep.subr.bf16.mxu0 0
    %680 = vmatpush1.bf16.msra.mxu0 0
    %681 = vmatprep.subr.bf16.mxu0 0
    %682 = vmatpush1.bf16.msra.mxu0 0
    %683 = vmatprep.subr.bf16.mxu0 0
    %684 = vmatpush1.bf16.msra.mxu0 0
    %685 = vmatprep.subr.bf16.mxu0 0
    %686 = vmatpush1.bf16.msra.mxu0 0
    %687 = vmatprep.subr.bf16.mxu0 0
    %688 = vmatpush1.bf16.msra.mxu0 0
    %689 = vmatprep.subr.bf16.mxu0 0
    %690 = vmatpush1.bf16.msra.mxu0 0
    %691 = vmatprep.subr.bf16.mxu0 0
    %692 = vmatpush1.bf16.msra.mxu0 0
    %693 = vmatprep.subr.bf16.mxu0 0
    %694 = vmatpush1.bf16.msra.mxu0 0
    %695 = vmatprep.subr.bf16.mxu0 0
    %696 = vmatpush1.bf16.msra.mxu0 0
    %697 = vmatprep.subr.bf16.mxu0 0
    %698 = vmatpush1.bf16.msra.mxu0 0
    %699 = vmatprep.subr.bf16.mxu0 0
    %700 = vmatpush1.bf16.msra.mxu0 0
    %701 = vmatprep.subr.bf16.mxu0 0
    %702 = vmatpush1.bf16.msra.mxu0 0
    %703 = vmatprep.subr.bf16.mxu0 0
    %704 = vmatpush1.bf16.msra.mxu0 0
    %705 = vmatprep.subr.bf16.mxu0 0
    %706 = vmatpush1.bf16.msra.mxu0 0
    %707 = vmatprep.mubr.bf16.mxu0 0
    %708 = vmatmul.mubr.bf16.gmra.mrb[0].mxu0 %v670
    %v709 = vpop.f32.mrb[0].mxu0
    %v710 = vadd.f32 0.0, %v709
    %v711 = vpop.f32.mrb[0].mxu0
    %v712 = vpop.f32.mrb[0].mxu0
    %v713 = vpop.f32.mrb[0].mxu0
    %714 = vdwg.mxu0
    %717 = vrot.lane.b32.xlu0 %v661, 8
    %v718 = vpop.permute.xlu0 %717
    %719 = vrot.lane.b32.xlu0 %v710, 8
    %v720 = vpop.permute.xlu0 %719
    %vm723 = vcmask 130112
    %724 = vst.msk [vmem:[#allocation2] sm:$0xff] %vm723, %v718
    %725 = vst.msk [vmem:[#allocation2 + $0x8] sm:$0xff] %vm723, %v720
    %726 = vrot.lane.b32.xlu0 %v271, 112
    %v727 = vpop.permute.xlu0 %726
    %728 = vrot.lane.b32.xlu0 %v273, 112
    %v729 = vpop.permute.xlu0 %728
    %v731 = vsel %vm277, %v727, 0
    %v734 = vsel %vm277, %v729, 0
    %736 = vmatprep.subr.bf16.mxu0 0
    %737 = vmatpush1.bf16.xpose.msra.mxu0 %v734
    %738 = vmatprep.subr.bf16.mxu0 0
    %739 = vmatpush1.bf16.xpose.msra.mxu0 0
    %740 = vmatprep.subr.bf16.mxu0 0
    %741 = vmatpush1.bf16.xpose.msra.mxu0 0
    %742 = vmatprep.subr.bf16.mxu0 0
    %743 = vmatpush1.bf16.xpose.msra.mxu0 0
    %744 = vmatprep.subr.bf16.mxu0 0
    %745 = vmatpush1.bf16.xpose.msra.mxu0 0
    %746 = vmatprep.subr.bf16.mxu0 0
    %747 = vmatpush1.bf16.xpose.msra.mxu0 0
    %748 = vmatprep.subr.bf16.mxu0 0
    %749 = vmatpush1.bf16.xpose.msra.mxu0 0
    %750 = vmatprep.subr.bf16.mxu0 0
    %751 = vmatpush1.bf16.xpose.msra.mxu0 0
    %752 = vmatprep.subr.bf16.mxu0 0
    %753 = vmatpush1.bf16.xpose.msra.mxu0 0
    %754 = vmatprep.subr.bf16.mxu0 0
    %755 = vmatpush1.bf16.xpose.msra.mxu0 0
    %756 = vmatprep.subr.bf16.mxu0 0
    %757 = vmatpush1.bf16.xpose.msra.mxu0 0
    %758 = vmatprep.subr.bf16.mxu0 0
    %759 = vmatpush1.bf16.xpose.msra.mxu0 0
    %760 = vmatprep.subr.bf16.mxu0 0
    %761 = vmatpush1.bf16.xpose.msra.mxu0 0
    %762 = vmatprep.subr.bf16.mxu0 0
    %763 = vmatpush1.bf16.xpose.msra.mxu0 0
    %764 = vmatprep.subr.bf16.mxu0 0
    %765 = vmatpush1.bf16.xpose.msra.mxu0 0
    %766 = vmatprep.subr.bf16.mxu0 0
    %767 = vmatpush1.bf16.xpose.msra.mxu0 0
    %768 = vmatprep.mubr.bf16.mxu0 0
    %769 = vmatmul.mubr.bf16.gmra.mrb[0].mxu0 %v731
    %v770 = vpop.f32.mrb[0].mxu0
    %v771 = vadd.f32 0.0, %v770
    %v772 = vpop.f32.mrb[0].mxu0
    %v773 = vpop.f32.mrb[0].mxu0
    %v774 = vpop.f32.mrb[0].mxu0
    %775 = vdwg.mxu0
    %776 = vrot.lane.b32.xlu0 %v272, 112
    %v777 = vpop.permute.xlu0 %776
    %778 = vrot.lane.b32.xlu0 %v274, 112
    %v779 = vpop.permute.xlu0 %778
    %v781 = vsel %vm277, %v777, 0
    %v784 = vsel %vm277, %v779, 0
    %786 = vmatprep.subr.bf16.mxu0 0
    %787 = vmatpush1.bf16.xpose.msra.mxu0 %v784
    %788 = vmatprep.subr.bf16.mxu0 0
    %789 = vmatpush1.bf16.xpose.msra.mxu0 0
    %790 = vmatprep.subr.bf16.mxu0 0
    %791 = vmatpush1.bf16.xpose.msra.mxu0 0
    %792 = vmatprep.subr.bf16.mxu0 0
    %793 = vmatpush1.bf16.xpose.msra.mxu0 0
    %794 = vmatprep.subr.bf16.mxu0 0
    %795 = vmatpush1.bf16.xpose.msra.mxu0 0
    %796 = vmatprep.subr.bf16.mxu0 0
    %797 = vmatpush1.bf16.xpose.msra.mxu0 0
    %798 = vmatprep.subr.bf16.mxu0 0
    %799 = vmatpush1.bf16.xpose.msra.mxu0 0
    %800 = vmatprep.subr.bf16.mxu0 0
    %801 = vmatpush1.bf16.xpose.msra.mxu0 0
    %802 = vmatprep.subr.bf16.mxu0 0
    %803 = vmatpush1.bf16.xpose.msra.mxu0 0
    %804 = vmatprep.subr.bf16.mxu0 0
    %805 = vmatpush1.bf16.xpose.msra.mxu0 0
    %806 = vmatprep.subr.bf16.mxu0 0
    %807 = vmatpush1.bf16.xpose.msra.mxu0 0
    %808 = vmatprep.subr.bf16.mxu0 0
    %809 = vmatpush1.bf16.xpose.msra.mxu0 0
    %810 = vmatprep.subr.bf16.mxu0 0
    %811 = vmatpush1.bf16.xpose.msra.mxu0 0
    %812 = vmatprep.subr.bf16.mxu0 0
    %813 = vmatpush1.bf16.xpose.msra.mxu0 0
    %814 = vmatprep.subr.bf16.mxu0 0
    %815 = vmatpush1.bf16.xpose.msra.mxu0 0
    %816 = vmatprep.subr.bf16.mxu0 0
    %817 = vmatpush1.bf16.xpose.msra.mxu0 0
    %818 = vmatprep.mubr.bf16.mxu0 0
    %819 = vmatmul.mubr.bf16.gmra.mrb[0].mxu0 %v781
    %v820 = vpop.f32.mrb[0].mxu0
    %v821 = vadd.f32 0.0, %v820
    %v822 = vpop.f32.mrb[0].mxu0
    %v823 = vpop.f32.mrb[0].mxu0
    %v824 = vpop.f32.mrb[0].mxu0
    %825 = vdwg.mxu0
    %v826 = vsel %vm277, %v771, -inf
    %827 = vmax.xlane.f32.xlu0 %v826
    %v828 = vpop.xlane.xlu0 %827
    %v829 = vsel %vm277, %v821, -inf
    %830 = vmax.xlane.f32.xlu0 %v829
    %v831 = vpop.xlane.xlu0 %830
    %v832 = vsub.f32 %v771, %v828
    %v833 = vsub.f32 %v821, %v831
    %v834 = vmul.f32 %v832, 1.442695
    %v835 = vpow.pop %v834
    %v836 = vmul.f32 %v833, 1.442695
    %v837 = vpow.pop %v836
    %v838 = vsel %vm277, %v835, 0.0
    %839 = vadd.xlane.f32.xlu0 %v838
    %v840 = vpop.xlane.xlu0 %839
    %v841 = vsel %vm277, %v837, 0.0
    %842 = vadd.xlane.f32.xlu0 %v841
    %v843 = vpop.xlane.xlu0 %842
    %v844 = vrcp.pop %v840
    %v845 = vrcp.pop %v843
    %v846 = vmul.f32 %v835, %v844
    %v847 = vmul.f32 %v837, %v845
    %v848 = vpack.c.bf16 %v846, %v846
    %v849 = vpack.c.bf16 %v847, %v847
    %850 = vrot.lane.b32.xlu0 %v275, 112
    %v851 = vpop.permute.xlu0 %850
    %v853 = vsel %vm277, %v848, 0
    %v856 = vsel %vm397, %v851, 0
    %858 = vmatprep.subr.bf16.mxu0 0
    %859 = vmatpush1.bf16.msra.mxu0 %v856
    %860 = vmatprep.subr.bf16.mxu0 0
    %861 = vmatpush1.bf16.msra.mxu0 0
    %862 = vmatprep.subr.bf16.mxu0 0
    %863 = vmatpush1.bf16.msra.mxu0 0
    %864 = vmatprep.subr.bf16.mxu0 0
    %865 = vmatpush1.bf16.msra.mxu0 0
    %866 = vmatprep.subr.bf16.mxu0 0
    %867 = vmatpush1.bf16.msra.mxu0 0
    %868 = vmatprep.subr.bf16.mxu0 0
    %869 = vmatpush1.bf16.msra.mxu0 0
    %870 = vmatprep.subr.bf16.mxu0 0
    %871 = vmatpush1.bf16.msra.mxu0 0
    %872 = vmatprep.subr.bf16.mxu0 0
    %873 = vmatpush1.bf16.msra.mxu0 0
    %874 = vmatprep.subr.bf16.mxu0 0
    %875 = vmatpush1.bf16.msra.mxu0 0
    %876 = vmatprep.subr.bf16.mxu0 0
    %877 = vmatpush1.bf16.msra.mxu0 0
    %878 = vmatprep.subr.bf16.mxu0 0
    %879 = vmatpush1.bf16.msra.mxu0 0
    %880 = vmatprep.subr.bf16.mxu0 0
    %881 = vmatpush1.bf16.msra.mxu0 0
    %882 = vmatprep.subr.bf16.mxu0 0
    %883 = vmatpush1.bf16.msra.mxu0 0
    %884 = vmatprep.subr.bf16.mxu0 0
    %885 = vmatpush1.bf16.msra.mxu0 0
    %886 = vmatprep.subr.bf16.mxu0 0
    %887 = vmatpush1.bf16.msra.mxu0 0
    %888 = vmatprep.subr.bf16.mxu0 0
    %889 = vmatpush1.bf16.msra.mxu0 0
    %890 = vmatprep.mubr.bf16.mxu0 0
    %891 = vmatmul.mubr.bf16.gmra.mrb[0].mxu0 %v853
    %v892 = vpop.f32.mrb[0].mxu0
    %v893 = vadd.f32 0.0, %v892
    %v894 = vpop.f32.mrb[0].mxu0
    %v895 = vpop.f32.mrb[0].mxu0
    %v896 = vpop.f32.mrb[0].mxu0
    %897 = vdwg.mxu0
    %898 = vrot.lane.b32.xlu0 %v276, 112
    %v899 = vpop.permute.xlu0 %898
    %v901 = vsel %vm277, %v849, 0
    %v904 = vsel %vm397, %v899, 0
    %906 = vmatprep.subr.bf16.mxu0 0
    %907 = vmatpush1.bf16.msra.mxu0 %v904
    %908 = vmatprep.subr.bf16.mxu0 0
    %909 = vmatpush1.bf16.msra.mxu0 0
    %910 = vmatprep.subr.bf16.mxu0 0
    %911 = vmatpush1.bf16.msra.mxu0 0
    %912 = vmatprep.subr.bf16.mxu0 0
    %913 = vmatpush1.bf16.msra.mxu0 0
    %914 = vmatprep.subr.bf16.mxu0 0
    %915 = vmatpush1.bf16.msra.mxu0 0
    %916 = vmatprep.subr.bf16.mxu0 0
    %917 = vmatpush1.bf16.msra.mxu0 0
    %918 = vmatprep.subr.bf16.mxu0 0
    %919 = vmatpush1.bf16.msra.mxu0 0
    %920 = vmatprep.subr.bf16.mxu0 0
    %921 = vmatpush1.bf16.msra.mxu0 0
    %922 = vmatprep.subr.bf16.mxu0 0
    %923 = vmatpush1.bf16.msra.mxu0 0
    %924 = vmatprep.subr.bf16.mxu0 0
    %925 = vmatpush1.bf16.msra.mxu0 0
    %926 = vmatprep.subr.bf16.mxu0 0
    %927 = vmatpush1.bf16.msra.mxu0 0
    %928 = vmatprep.subr.bf16.mxu0 0
    %929 = vmatpush1.bf16.msra.mxu0 0
    %930 = vmatprep.subr.bf16.mxu0 0
    %931 = vmatpush1.bf16.msra.mxu0 0
    %932 = vmatprep.subr.bf16.mxu0 0
    %933 = vmatpush1.bf16.msra.mxu0 0
    %934 = vmatprep.subr.bf16.mxu0 0
    %935 = vmatpush1.bf16.msra.mxu0 0
    %936 = vmatprep.subr.bf16.mxu0 0
    %937 = vmatpush1.bf16.msra.mxu0 0
    %938 = vmatprep.mubr.bf16.mxu0 0
    %939 = vmatmul.mubr.bf16.gmra.mrb[0].mxu0 %v901
    %v940 = vpop.f32.mrb[0].mxu0
    %v941 = vadd.f32 0.0, %v940
    %v942 = vpop.f32.mrb[0].mxu0
    %v943 = vpop.f32.mrb[0].mxu0
    %v944 = vpop.f32.mrb[0].mxu0
    %945 = vdwg.mxu0
    %948 = vrot.lane.b32.xlu0 %v893, 16
    %v949 = vpop.permute.xlu0 %948
    %950 = vrot.lane.b32.xlu0 %v941, 16
    %v951 = vpop.permute.xlu0 %950
    %vm954 = vcmask 195712
    %955 = vst.msk [vmem:[#allocation2] sm:$0xff] %vm954, %v949
    %956 = vst.msk [vmem:[#allocation2 + $0x8] sm:$0xff] %vm954, %v951
    %957 = vrot.lane.b32.xlu0 %v271, 104
    %v958 = vpop.permute.xlu0 %957
    %959 = vrot.lane.b32.xlu0 %v273, 104
    %v960 = vpop.permute.xlu0 %959
    %v962 = vsel %vm277, %v958, 0
    %v965 = vsel %vm277, %v960, 0
    %967 = vmatprep.subr.bf16.mxu0 0
    %968 = vmatpush1.bf16.xpose.msra.mxu0 %v965
    %969 = vmatprep.subr.bf16.mxu0 0
    %970 = vmatpush1.bf16.xpose.msra.mxu0 0
    %971 = vmatprep.subr.bf16.mxu0 0
    %972 = vmatpush1.bf16.xpose.msra.mxu0 0
    %973 = vmatprep.subr.bf16.mxu0 0
    %974 = vmatpush1.bf16.xpose.msra.mxu0 0
    %975 = vmatprep.subr.bf16.mxu0 0
    %976 = vmatpush1.bf16.xpose.msra.mxu0 0
    %977 = vmatprep.subr.bf16.mxu0 0
    %978 = vmatpush1.bf16.xpose.msra.mxu0 0
    %979 = vmatprep.subr.bf16.mxu0 0
    %980 = vmatpush1.bf16.xpose.msra.mxu0 0
    %981 = vmatprep.subr.bf16.mxu0 0
    %982 = vmatpush1.bf16.xpose.msra.mxu0 0
    %983 = vmatprep.subr.bf16.mxu0 0
    %984 = vmatpush1.bf16.xpose.msra.mxu0 0
    %985 = vmatprep.subr.bf16.mxu0 0
    %986 = vmatpush1.bf16.xpose.msra.mxu0 0
    %987 = vmatprep.subr.bf16.mxu0 0
    %988 = vmatpush1.bf16.xpose.msra.mxu0 0
    %989 = vmatprep.subr.bf16.mxu0 0
    %990 = vmatpush1.bf16.xpose.msra.mxu0 0
    %991 = vmatprep.subr.bf16.mxu0 0
    %992 = vmatpush1.bf16.xpose.msra.mxu0 0
    %993 = vmatprep.subr.bf16.mxu0 0
    %994 = vmatpush1.bf16.xpose.msra.mxu0 0
    %995 = vmatprep.subr.bf16.mxu0 0
    %996 = vmatpush1.bf16.xpose.msra.mxu0 0
    %997 = vmatprep.subr.bf16.mxu0 0
    %998 = vmatpush1.bf16.xpose.msra.mxu0 0
    %999 = vmatprep.mubr.bf16.mxu0 0
    %1000 = vmatmul.mubr.bf16.gmra.mrb[0].mxu0 %v962
    %v1001 = vpop.f32.mrb[0].mxu0
    %v1002 = vadd.f32 0.0, %v1001
    %v1003 = vpop.f32.mrb[0].mxu0
    %v1004 = vpop.f32.mrb[0].mxu0
    %v1005 = vpop.f32.mrb[0].mxu0
    %1006 = vdwg.mxu0
    %1007 = vrot.lane.b32.xlu0 %v272, 104
    %v1008 = vpop.permute.xlu0 %1007
    %1009 = vrot.lane.b32.xlu0 %v274, 104
    %v1010 = vpop.permute.xlu0 %1009
    %v1012 = vsel %vm277, %v1008, 0
    %v1015 = vsel %vm277, %v1010, 0
    %1017 = vmatprep.subr.bf16.mxu0 0
    %1018 = vmatpush1.bf16.xpose.msra.mxu0 %v1015
    %1019 = vmatprep.subr.bf16.mxu0 0
    %1020 = vmatpush1.bf16.xpose.msra.mxu0 0
    %1021 = vmatprep.subr.bf16.mxu0 0
    %1022 = vmatpush1.bf16.xpose.msra.mxu0 0
    %1023 = vmatprep.subr.bf16.mxu0 0
    %1024 = vmatpush1.bf16.xpose.msra.mxu0 0
    %1025 = vmatprep.subr.bf16.mxu0 0
    %1026 = vmatpush1.bf16.xpose.msra.mxu0 0
    %1027 = vmatprep.subr.bf16.mxu0 0
    %1028 = vmatpush1.bf16.xpose.msra.mxu0 0
    %1029 = vmatprep.subr.bf16.mxu0 0
    %1030 = vmatpush1.bf16.xpose.msra.mxu0 0
    %1031 = vmatprep.subr.bf16.mxu0 0
    %1032 = vmatpush1.bf16.xpose.msra.mxu0 0
    %1033 = vmatprep.subr.bf16.mxu0 0
    %1034 = vmatpush1.bf16.xpose.msra.mxu0 0
    %1035 = vmatprep.subr.bf16.mxu0 0
    %1036 = vmatpush1.bf16.xpose.msra.mxu0 0
    %1037 = vmatprep.subr.bf16.mxu0 0
    %1038 = vmatpush1.bf16.xpose.msra.mxu0 0
    %1039 = vmatprep.subr.bf16.mxu0 0
    %1040 = vmatpush1.bf16.xpose.msra.mxu0 0
    %1041 = vmatprep.subr.bf16.mxu0 0
    %1042 = vmatpush1.bf16.xpose.msra.mxu0 0
    %1043 = vmatprep.subr.bf16.mxu0 0
    %1044 = vmatpush1.bf16.xpose.msra.mxu0 0
    %1045 = vmatprep.subr.bf16.mxu0 0
    %1046 = vmatpush1.bf16.xpose.msra.mxu0 0
    %1047 = vmatprep.subr.bf16.mxu0 0
    %1048 = vmatpush1.bf16.xpose.msra.mxu0 0
    %1049 = vmatprep.mubr.bf16.mxu0 0
    %1050 = vmatmul.mubr.bf16.gmra.mrb[0].mxu0 %v1012
    %v1051 = vpop.f32.mrb[0].mxu0
    %v1052 = vadd.f32 0.0, %v1051
    %v1053 = vpop.f32.mrb[0].mxu0
    %v1054 = vpop.f32.mrb[0].mxu0
    %v1055 = vpop.f32.mrb[0].mxu0
    %1056 = vdwg.mxu0
    %v1057 = vsel %vm277, %v1002, -inf
    %1058 = vmax.xlane.f32.xlu0 %v1057
    %v1059 = vpop.xlane.xlu0 %1058
    %v1060 = vsel %vm277, %v1052, -inf
    %1061 = vmax.xlane.f32.xlu0 %v1060
    %v1062 = vpop.xlane.xlu0 %1061
    %v1063 = vsub.f32 %v1002, %v1059
    %v1064 = vsub.f32 %v1052, %v1062
    %v1065 = vmul.f32 %v1063, 1.442695
    %v1066 = vpow.pop %v1065
    %v1067 = vmul.f32 %v1064, 1.442695
    %v1068 = vpow.pop %v1067
    %v1069 = vsel %vm277, %v1066, 0.0
    %1070 = vadd.xlane.f32.xlu0 %v1069
    %v1071 = vpop.xlane.xlu0 %1070
    %v1072 = vsel %vm277, %v1068, 0.0
    %1073 = vadd.xlane.f32.xlu0 %v1072
    %v1074 = vpop.xlane.xlu0 %1073
    %v1075 = vrcp.pop %v1071
    %v1076 = vrcp.pop %v1074
    %v1077 = vmul.f32 %v1066, %v1075
    %v1078 = vmul.f32 %v1068, %v1076
    %v1079 = vpack.c.bf16 %v1077, %v1077
    %v1080 = vpack.c.bf16 %v1078, %v1078
    %1081 = vrot.lane.b32.xlu0 %v275, 104
    %v1082 = vpop.permute.xlu0 %1081
    %v1084 = vsel %vm277, %v1079, 0
    %v1087 = vsel %vm397, %v1082, 0
    %1089 = vmatprep.subr.bf16.mxu0 0
    %1090 = vmatpush1.bf16.msra.mxu0 %v1087
    %1091 = vmatprep.subr.bf16.mxu0 0
    %1092 = vmatpush1.bf16.msra.mxu0 0
    %1093 = vmatprep.subr.bf16.mxu0 0
    %1094 = vmatpush1.bf16.msra.mxu0 0
    %1095 = vmatprep.subr.bf16.mxu0 0
    %1096 = vmatpush1.bf16.msra.mxu0 0
    %1097 = vmatprep.subr.bf16.mxu0 0
    %1098 = vmatpush1.bf16.msra.mxu0 0
    %1099 = vmatprep.subr.bf16.mxu0 0
    %1100 = vmatpush1.bf16.msra.mxu0 0
    %1101 = vmatprep.subr.bf16.mxu0 0
    %1102 = vmatpush1.bf16.msra.mxu0 0
    %1103 = vmatprep.subr.bf16.mxu0 0
    %1104 = vmatpush1.bf16.msra.mxu0 0
    %1105 = vmatprep.subr.bf16.mxu0 0
    %1106 = vmatpush1.bf16.msra.mxu0 0
    %1107 = vmatprep.subr.bf16.mxu0 0
    %1108 = vmatpush1.bf16.msra.mxu0 0
    %1109 = vmatprep.subr.bf16.mxu0 0
    %1110 = vmatpush1.bf16.msra.mxu0 0
    %1111 = vmatprep.subr.bf16.mxu0 0
    %1112 = vmatpush1.bf16.msra.mxu0 0
    %1113 = vmatprep.subr.bf16.mxu0 0
    %1114 = vmatpush1.bf16.msra.mxu0 0
    %1115 = vmatprep.subr.bf16.mxu0 0
    %1116 = vmatpush1.bf16.msra.mxu0 0
    %1117 = vmatprep.subr.bf16.mxu0 0
    %1118 = vmatpush1.bf16.msra.mxu0 0
    %1119 = vmatprep.subr.bf16.mxu0 0
    %1120 = vmatpush1.bf16.msra.mxu0 0
    %1121 = vmatprep.mubr.bf16.mxu0 0
    %1122 = vmatmul.mubr.bf16.gmra.mrb[0].mxu0 %v1084
    %v1123 = vpop.f32.mrb[0].mxu0
    %v1124 = vadd.f32 0.0, %v1123
    %v1125 = vpop.f32.mrb[0].mxu0
    %v1126 = vpop.f32.mrb[0].mxu0
    %v1127 = vpop.f32.mrb[0].mxu0
    %1128 = vdwg.mxu0
    %1129 = vrot.lane.b32.xlu0 %v276, 104
    %v1130 = vpop.permute.xlu0 %1129
    %v1132 = vsel %vm277, %v1080, 0
    %v1135 = vsel %vm397, %v1130, 0
    %1137 = vmatprep.subr.bf16.mxu0 0
    %1138 = vmatpush1.bf16.msra.mxu0 %v1135
    %1139 = vmatprep.subr.bf16.mxu0 0
    %1140 = vmatpush1.bf16.msra.mxu0 0
    %1141 = vmatprep.subr.bf16.mxu0 0
    %1142 = vmatpush1.bf16.msra.mxu0 0
    %1143 = vmatprep.subr.bf16.mxu0 0
    %1144 = vmatpush1.bf16.msra.mxu0 0
    %1145 = vmatprep.subr.bf16.mxu0 0
    %1146 = vmatpush1.bf16.msra.mxu0 0
    %1147 = vmatprep.subr.bf16.mxu0 0
    %1148 = vmatpush1.bf16.msra.mxu0 0
    %1149 = vmatprep.subr.bf16.mxu0 0
    %1150 = vmatpush1.bf16.msra.mxu0 0
    %1151 = vmatprep.subr.bf16.mxu0 0
    %1152 = vmatpush1.bf16.msra.mxu0 0
    %1153 = vmatprep.subr.bf16.mxu0 0
    %1154 = vmatpush1.bf16.msra.mxu0 0
    %1155 = vmatprep.subr.bf16.mxu0 0
    %1156 = vmatpush1.bf16.msra.mxu0 0
    %1157 = vmatprep.subr.bf16.mxu0 0
    %1158 = vmatpush1.bf16.msra.mxu0 0
    %1159 = vmatprep.subr.bf16.mxu0 0
    %1160 = vmatpush1.bf16.msra.mxu0 0
    %1161 = vmatprep.subr.bf16.mxu0 0
    %1162 = vmatpush1.bf16.msra.mxu0 0
    %1163 = vmatprep.subr.bf16.mxu0 0
    %1164 = vmatpush1.bf16.msra.mxu0 0
    %1165 = vmatprep.subr.bf16.mxu0 0
    %1166 = vmatpush1.bf16.msra.mxu0 0
    %1167 = vmatprep.subr.bf16.mxu0 0
    %1168 = vmatpush1.bf16.msra.mxu0 0
    %1169 = vmatprep.mubr.bf16.mxu0 0
    %1170 = vmatmul.mubr.bf16.gmra.mrb[0].mxu0 %v1132
    %v1171 = vpop.f32.mrb[0].mxu0
    %v1172 = vadd.f32 0.0, %v1171
    %v1173 = vpop.f32.mrb[0].mxu0
    %v1174 = vpop.f32.mrb[0].mxu0
    %v1175 = vpop.f32.mrb[0].mxu0
    %1176 = vdwg.mxu0
    %1179 = vrot.lane.b32.xlu0 %v1124, 24
    %v1180 = vpop.permute.xlu0 %1179
    %1181 = vrot.lane.b32.xlu0 %v1172, 24
    %v1182 = vpop.permute.xlu0 %1181
    %vm1185 = vcmask 261312
    %1186 = vst.msk [vmem:[#allocation2] sm:$0xff] %vm1185, %v1180
    %1187 = vst.msk [vmem:[#allocation2 + $0x8] sm:$0xff] %vm1185, %v1182
    %v1188 = vld [vmem:[#allocation2] sm:$0xff]
    %v1189 = vld [vmem:[#allocation2 + $0x8] sm:$0xff]
    %v1190 = vpack.c.bf16 %v1189, %v1188
    %v1191 = vld [vmem:[#allocation8] sm:$0xf]
    %v1192 = vld [vmem:[#allocation8 + $0x4] sm:$0xf]
    %v1193 = vld [vmem:[#allocation8 + $0x8] sm:$0xf]
    %v1194 = vld [vmem:[#allocation8 + $0xc] sm:$0xf]
    %v1195 = vld [vmem:[%s2 + $0x3] sm:$0x1]
    %v1196 = vlaneseq
    %v1197 = vshrl.u32 %v1196, 7
    %v1198 = vsub.s32 0, %v1197
    %v1199 = vrot.slane %v1195, %v1198
    %v1204 = vunpack.c.l.b16 %v1191
    %v1205 = vunpack.c.l.b16 %v1192
    %v1206 = vunpack.c.l.b16 %v1193
    %v1207 = vunpack.c.l.b16 %v1194
    %v1208 = vpack.c.b16 %v1205, %v1204
    %v1209 = vpack.c.b16 %v1207, %v1206
    %v1213 = vsel %vm93, %v1190, 0
    %1215 = vmatprep.subr.bf16.mxu0 0
    %1216 = vmatpush1.bf16.msra.mxu0 %v1208
    %1217 = vmatprep.subr.bf16.mxu0 0
    %1218 = vmatpush1.bf16.msra.mxu0 %v1209
    %1219 = vmatprep.subr.bf16.mxu0 0
    %1220 = vmatpush1.bf16.msra.mxu0 0
    %1221 = vmatprep.subr.bf16.mxu0 0
    %1222 = vmatpush1.bf16.msra.mxu0 0
    %1223 = vmatprep.subr.bf16.mxu0 0
    %1224 = vmatpush1.bf16.msra.mxu0 0
    %1225 = vmatprep.subr.bf16.mxu0 0
    %1226 = vmatpush1.bf16.msra.mxu0 0
    %1227 = vmatprep.subr.bf16.mxu0 0
    %1228 = vmatpush1.bf16.msra.mxu0 0
    %1229 = vmatprep.subr.bf16.mxu0 0
    %1230 = vmatpush1.bf16.msra.mxu0 0
    %1231 = vmatprep.subr.bf16.mxu0 0
    %1232 = vmatpush1.bf16.msra.mxu0 0
    %1233 = vmatprep.subr.bf16.mxu0 0
    %1234 = vmatpush1.bf16.msra.mxu0 0
    %1235 = vmatprep.subr.bf16.mxu0 0
    %1236 = vmatpush1.bf16.msra.mxu0 0
    %1237 = vmatprep.subr.bf16.mxu0 0
    %1238 = vmatpush1.bf16.msra.mxu0 0
    %1239 = vmatprep.subr.bf16.mxu0 0
    %1240 = vmatpush1.bf16.msra.mxu0 0
    %1241 = vmatprep.subr.bf16.mxu0 0
    %1242 = vmatpush1.bf16.msra.mxu0 0
    %1243 = vmatprep.subr.bf16.mxu0 0
    %1244 = vmatpush1.bf16.msra.mxu0 0
    %1245 = vmatprep.subr.bf16.mxu0 0
    %1246 = vmatpush1.bf16.msra.mxu0 0
    %1247 = vmatprep.mubr.bf16.mxu0 0
    %1248 = vmatmul.mubr.bf16.gmra.mrb[0].mxu0 %v1213
    %v1249 = vpop.f32.mrb[0].mxu0
    %v1250 = vadd.f32 %v1199, %v1249
    %v1251 = vpop.f32.mrb[0].mxu0
    %v1252 = vpop.f32.mrb[0].mxu0
    %v1253 = vadd.f32 %v1199, %v1252
    %v1254 = vpop.f32.mrb[0].mxu0
    %1255 = vdwg.mxu0
    %1256 = vst.msk [vmem:[#allocation9] sm:$0xff] %vm93, %v1250
    %1257 = vst.msk [vmem:[#allocation9 + $0x8] sm:$0xff] %vm93, %v1253
    // Predicated region
    $region30: #{tpu_custom_call.1} parent=1 // pred_check
      _
    $region31: #{tpu_custom_call.1} parent=1 // pred_check_branch
      %1259 = sbr.rel (0) target = $region33
    $region32: #{tpu_custom_call.1} parent=1 // pred_region
      %s1261 = ssub.s32 256, 256
      %1262 = vsyncadd [#allocation5], %s1261
      %s1263 = sshll.u32 [#allocation9], 4
      %s1264 = int_to_ptr.vmem [resolvable:$true] %s1263
      %1269 = dma.vmem_to_hbm [thread:$0]  %s1264, 256, %s4, [#allocation5], 128, 128, 8
    $region33: #{tpu_custom_call.1} parent=1 // pred_fallthru
      _
    // Predicated region
    $region34: #{tpu_custom_call.1} parent=1 // pred_check
      _
    $region35: #{tpu_custom_call.1} parent=1 // pred_check_branch
      %1271 = sbr.rel (0) target = $region37
    $region36: #{tpu_custom_call.1} parent=1 // pred_region
      %1272 = dma.done [#allocation5], 256
    $region37: #{tpu_custom_call.1} parent=1 // pred_fallthru
      _
    %1273 = vsyncpa [#allocation4], 1
    %1274 = vsyncpa [#allocation7], 1
    %1275 = vsyncpa [#allocation5], 1

</llo_original>
